<compile_context>
chip_gen: v6e
topology: v6e:2x2x1
jax: 0.10.0
libtpu: 0.0.40
codegen_flags: <defaults>
</compile_context>

<pallas_src>
import functools

import jax
import jax.numpy as jnp
from jax.experimental import pallas as pl
from jax.experimental.pallas import tpu as pltpu

INPUT_DATA_DIM = 784
HIDDEN_DIM = 400
LATENT_DIM = 64

HID_PAD = 512                 # 4 * 128 (padded hidden dim)
FUSED_OUT = 2 * LATENT_DIM    # 128: [mu | logvar]


def _round_up(n, m):
    return ((n + m - 1) // m) * m


def _encoder_kernel(x_ref, w1_ref, b1_ref, wh_ref, bh_ref, out_ref):
    # Cast the streamed f32 activation to bf16 in-kernel (VPU filler, hidden
    # under the MXU); accumulate in f32 on the MXU.
    x_bf = x_ref[...].astype(jnp.bfloat16)
    # Hidden layer: Linear(784 -> 400/512-padded) + bias + ReLU, all f32.
    h = jnp.dot(x_bf, w1_ref[...], preferred_element_type=jnp.float32)
    h = jnp.maximum(h + b1_ref[...], 0.0)
    # Fused heads: Linear(400 -> 64) x2 as one 128-wide matmul (lane-dense store).
    out_ref[...] = (
        jnp.dot(h.astype(jnp.bfloat16), wh_ref[...],
                preferred_element_type=jnp.float32)
        + bh_ref[...]
    )


def pack_params(params):
    """Pad / fuse / cast the f32 (in, out)-layout params for the kernel.

    Returns:
      w1_bf16 (784, 512), b1_f32 (1, 512), wh_bf16 (512, 128), bh_f32 (1, 128).

    Zero padding keeps the math exact: padded hidden columns get zero W1
    columns and zero bias (-> ReLU(0) = 0), and the corresponding fused
    head-weight rows are zero.
    """
    w1, b1, wmu, bmu, wlv, blv = params
    w1_p = jnp.pad(w1, ((0, 0), (0, HID_PAD - HIDDEN_DIM)))           # (784, 512)
    b1_p = jnp.pad(b1, ((0, 0), (0, HID_PAD - HIDDEN_DIM)))           # (1, 512)
    wh = jnp.concatenate([wmu, wlv], axis=1)                          # (400, 128)
    wh_p = jnp.pad(wh, ((0, HID_PAD - HIDDEN_DIM), (0, 0)))           # (512, 128)
    bh = jnp.concatenate([bmu, blv], axis=1)                          # (1, 128)
    return (w1_p.astype(jnp.bfloat16), b1_p.astype(jnp.float32),
            wh_p.astype(jnp.bfloat16), bh.astype(jnp.float32))


def _choose_tm(B):
    """Pick a batch-tile size.

    Priorities (per perf review):
      * >= 2 grid steps where possible so "parallel" shards the batch across
        the two v7x TensorCores and the x DMA overlaps compute,
      * large tiles for big batches (amortize MXU RHS re-push + step overhead),
      * padded rows kept to <= ~12.5% of B.
    """
    B = max(int(B), 1)
    if B <= 16:
        return 16                      # one tiny tile; nothing worth sharding.
    cap = 1024 if B >= 4096 else (512 if B >= 1024 else 256)
    for tm in (1024, 512, 256, 128, 64, 32, 16):
        if tm > cap:
            continue
        b_pad = _round_up(B, tm)
        if b_pad // tm >= 2 and (b_pad - B) * 8 <= B:
            return tm
    return 16


@functools.partial(jax.jit, static_argnames=("tm",))
def _forward_impl(x_flat_padded, w1, b1, wh, bh, *, tm):
    b_pad = x_flat_padded.shape[0]
    grid = (b_pad // tm,)

    flops = 2 * b_pad * INPUT_DATA_DIM * HID_PAD + 2 * b_pad * HID_PAD * FUSED_OUT
    bytes_accessed = (
        b_pad * INPUT_DATA_DIM * 4       # x (f32, streamed)
        + INPUT_DATA_DIM * HID_PAD * 2   # w1 (bf16, resident)
        + HID_PAD * FUSED_OUT * 2        # fused head weights (bf16, resident)
        + (HID_PAD + FUSED_OUT) * 4      # biases (f32)
        + b_pad * FUSED_OUT * 4          # output (f32)
    )

    # VMEM footprint: double-buffered x/out tiles + resident weights, plus
    # headroom for the f32 hidden activation and compiler scratch.
    vmem_bytes = (
        2 * tm * INPUT_DATA_DIM * 4      # x tiles (f32, double-buffered)
        + 2 * tm * FUSED_OUT * 4         # out tiles (f32, double-buffered)
        + tm * HID_PAD * 4               # hidden activation (f32)
        + INPUT_DATA_DIM * HID_PAD * 2   # w1 (bf16)
        + HID_PAD * 4                    # b1 (f32)
        + HID_PAD * FUSED_OUT * 2        # fused heads (bf16)
        + FUSED_OUT * 4                  # fused bias (f32)
    )
    vmem_limit = min(32 << 20, max(8 << 20, _round_up(vmem_bytes * 3 // 2, 1 << 20)))

    out = pl.pallas_call(
        _encoder_kernel,
        out_shape=jax.ShapeDtypeStruct((b_pad, FUSED_OUT), jnp.float32),
        grid=grid,
        in_specs=[
            # x tile: streamed.  Last dim (784) == full array dim, so the
            # 128-divisibility rule does not apply; tm is a multiple of 8/16.
            pl.BlockSpec((tm, INPUT_DATA_DIM), lambda i: (i, 0)),
            # Weights / biases: VMEM-resident (constant index_map).
            pl.BlockSpec((INPUT_DATA_DIM, HID_PAD), lambda i: (0, 0)),
            pl.BlockSpec((1, HID_PAD), lambda i: (0, 0)),
            pl.BlockSpec((HID_PAD, FUSED_OUT), lambda i: (0, 0)),
            pl.BlockSpec((1, FUSED_OUT), lambda i: (0, 0)),
        ],
        out_specs=pl.BlockSpec((tm, FUSED_OUT), lambda i: (i, 0)),
        compiler_params=pltpu.CompilerParams(
            dimension_semantics=("parallel",),
            vmem_limit_bytes=vmem_limit,
        ),
        cost_estimate=pl.CostEstimate(
            flops=flops, transcendentals=0, bytes_accessed=bytes_accessed),
    )(x_flat_padded, w1, b1, wh, bh)
    return out


def mnist_encoder_forward(x, packed_params):
    """x: (B, 1, 28, 28) float32. Returns (mu, logvar), each (B, 64) float32."""
    B = x.shape[0]
    x_flat = x.reshape(B, -1)            # (B, 784), row-major == PyTorch .view

    tm = _choose_tm(B)
    b_pad = _round_up(B, tm)
    # Only batch-row padding; contraction dim stays 784 (no extra HBM pass).
    x_p = jnp.pad(x_flat, ((0, b_pad - B), (0, 0))) if b_pad != B else x_flat

    out = _forward_impl(x_p, *packed_params, tm=tm)   # (b_pad, 128) f32
    mu = out[:B, :LATENT_DIM]
    logvar = out[:B, LATENT_DIM:FUSED_OUT]
    return mu, logvar


def init_params(key):
    """Deterministic parameter init. Weights stored as (in, out), f32
    (i.e. the transpose of PyTorch's (out, in) nn.Linear layout)."""
    k1, k2, k3, k4, k5, k6 = jax.random.split(key, 6)
    s1 = 1.0 / jnp.sqrt(INPUT_DATA_DIM)
    s2 = 1.0 / jnp.sqrt(HIDDEN_DIM)
    w1 = jax.random.uniform(k1, (INPUT_DATA_DIM, HIDDEN_DIM), jnp.float32, -s1, s1)
    b1 = jax.random.uniform(k2, (1, HIDDEN_DIM), jnp.float32, -s1, s1)
    wmu = jax.random.uniform(k3, (HIDDEN_DIM, LATENT_DIM), jnp.float32, -s2, s2)
    bmu = jax.random.uniform(k4, (1, LATENT_DIM), jnp.float32, -s2, s2)
    wlv = jax.random.uniform(k5, (HIDDEN_DIM, LATENT_DIM), jnp.float32, -s2, s2)
    blv = jax.random.uniform(k6, (1, LATENT_DIM), jnp.float32, -s2, s2)
    return (w1, b1, wmu, bmu, wlv, blv)


def reference_forward(x, params):
    """Plain-JAX f32 reference matching the PyTorch forward."""
    w1, b1, wmu, bmu, wlv, blv = params
    h = x.reshape(x.shape[0], -1)
    h = jnp.maximum(h @ w1 + b1, 0.0)
    return h @ wmu + bmu, h @ wlv + blv


if __name__ == "__main__":
    key = jax.random.PRNGKey(0)
    kx, kp = jax.random.split(key)

    B = 8
    x = jax.random.normal(kx, (B, 1, 28, 28), dtype=jnp.float32)
    params = init_params(kp)
    packed = pack_params(params)

    mu, logvar = mnist_encoder_forward(x, packed)
    jax.block_until_ready((mu, logvar))

    mu_ref, lv_ref = reference_forward(x, params)
    assert mu.shape == (B, LATENT_DIM) and logvar.shape == (B, LATENT_DIM)
    # bf16 MXU operands with f32 accumulation -> loosened tolerance vs. f32 ref.
    assert jnp.allclose(mu, mu_ref, atol=2e-2, rtol=2e-2), (
        float(jnp.max(jnp.abs(mu - mu_ref))))
    assert jnp.allclose(logvar, lv_ref, atol=2e-2, rtol=2e-2), (
        float(jnp.max(jnp.abs(logvar - lv_ref))))

    print("KERNEL_OK")
</pallas_src>

<mosaic_0001>
module attributes {stable_mosaic.version = 11 : i64} {
  func.func @_encoder_kernel(%arg0: i32, %arg1: memref<16x784xf32, #tpu.memory_space<vmem>>, %arg2: memref<784x512xbf16, #tpu.memory_space<vmem>>, %arg3: memref<1x512xf32, #tpu.memory_space<vmem>>, %arg4: memref<512x128xbf16, #tpu.memory_space<vmem>>, %arg5: memref<1x128xf32, #tpu.memory_space<vmem>>, %arg6: memref<16x128xf32, #tpu.memory_space<vmem>>) attributes {dimension_semantics = [#tpu.dimension_semantics<parallel>], iteration_bounds = array<i64: 1>, scalar_prefetch = 0 : i64, scratch_operands = 0 : i64, tpu.core_type = #tpu.core_type<tc>, window_params = [{transform_indices = @transform_0, window_bounds = array<i64: 16, 784>}, {pipeline_mode = #tpu.pipeline_mode<synchronous>, transform_indices = @transform_1, window_bounds = array<i64: 784, 512>}, {pipeline_mode = #tpu.pipeline_mode<synchronous>, transform_indices = @transform_2, window_bounds = array<i64: 1, 512>}, {pipeline_mode = #tpu.pipeline_mode<synchronous>, transform_indices = @transform_3, window_bounds = array<i64: 512, 128>}, {pipeline_mode = #tpu.pipeline_mode<synchronous>, transform_indices = @transform_4, window_bounds = array<i64: 1, 128>}, {transform_indices = @transform_5, window_bounds = array<i64: 16, 128>}]} {
    %c0 = arith.constant 0 : index
    %c0_0 = arith.constant 0 : index
    %0 = vector.load %arg1[%c0, %c0_0] : memref<16x784xf32, #tpu.memory_space<vmem>>, vector<16x784xf32>
    %1 = arith.truncf %0 : vector<16x784xf32> to vector<16x784xbf16>
    %c0_1 = arith.constant 0 : index
    %c0_2 = arith.constant 0 : index
    %2 = vector.load %arg2[%c0_1, %c0_2] : memref<784x512xbf16, #tpu.memory_space<vmem>>, vector<784x512xbf16>
    %cst = arith.constant dense<0.000000e+00> : vector<16x512xf32>
    %3 = tpu.matmul %1, %2, %cst {dimension_numbers = #tpu.dot_dimension_numbers<[1], [0], [0], [1], [0, 0, 1, 1], [], []>} : vector<16x784xbf16>, vector<784x512xbf16>, vector<16x512xf32> -> vector<16x512xf32>
    %c0_3 = arith.constant 0 : index
    %c0_4 = arith.constant 0 : index
    %4 = vector.load %arg3[%c0_3, %c0_4] : memref<1x512xf32, #tpu.memory_space<vmem>>, vector<1x512xf32>
    %5 = vector.broadcast %4 : vector<1x512xf32> to vector<16x512xf32>
    %6 = arith.addf %3, %5 : vector<16x512xf32>
    %cst_5 = arith.constant 0.000000e+00 : f32
    %7 = vector.broadcast %cst_5 : f32 to vector<16x512xf32>
    %8 = arith.maximumf %6, %7 : vector<16x512xf32>
    %9 = arith.truncf %8 : vector<16x512xf32> to vector<16x512xbf16>
    %c0_6 = arith.constant 0 : index
    %c0_7 = arith.constant 0 : index
    %10 = vector.load %arg4[%c0_6, %c0_7] : memref<512x128xbf16, #tpu.memory_space<vmem>>, vector<512x128xbf16>
    %cst_8 = arith.constant dense<0.000000e+00> : vector<16x128xf32>
    %11 = tpu.matmul %9, %10, %cst_8 {dimension_numbers = #tpu.dot_dimension_numbers<[1], [0], [0], [1], [0, 0, 1, 1], [], []>} : vector<16x512xbf16>, vector<512x128xbf16>, vector<16x128xf32> -> vector<16x128xf32>
    %c0_9 = arith.constant 0 : index
    %c0_10 = arith.constant 0 : index
    %12 = vector.load %arg5[%c0_9, %c0_10] : memref<1x128xf32, #tpu.memory_space<vmem>>, vector<1x128xf32>
    %13 = vector.broadcast %12 : vector<1x128xf32> to vector<16x128xf32>
    %14 = arith.addf %11, %13 : vector<16x128xf32>
    %c0_11 = arith.constant 0 : index
    %c0_12 = arith.constant 0 : index
    %15 = vector.load %arg6[%c0_11, %c0_12] : memref<16x128xf32, #tpu.memory_space<vmem>>, vector<16x128xf32>
    tpu.vector_store %arg6[%c0_11, %c0_12], %14 {strides = array<i32>} : memref<16x128xf32, #tpu.memory_space<vmem>>, vector<16x128xf32>,
    return
  }
  func.func @transform_0(%arg0: i32) -> (i32, i32) {
    %c0_i32 = arith.constant 0 : i32
    %c0_i32_0 = arith.constant 0 : i32
    return %arg0, %c0_i32 : i32, i32
  }
  func.func @transform_1(%arg0: i32) -> (i32, i32) {
    %c0_i32 = arith.constant 0 : i32
    %c0_i32_0 = arith.constant 0 : i32
    %c0_i32_1 = arith.constant 0 : i32
    return %c0_i32, %c0_i32_0 : i32, i32
  }
  func.func @transform_2(%arg0: i32) -> (i32, i32) {
    %c0_i32 = arith.constant 0 : i32
    %c0_i32_0 = arith.constant 0 : i32
    %c0_i32_1 = arith.constant 0 : i32
    return %c0_i32, %c0_i32_0 : i32, i32
  }
  func.func @transform_3(%arg0: i32) -> (i32, i32) {
    %c0_i32 = arith.constant 0 : i32
    %c0_i32_0 = arith.constant 0 : i32
    %c0_i32_1 = arith.constant 0 : i32
    return %c0_i32, %c0_i32_0 : i32, i32
  }
  func.func @transform_4(%arg0: i32) -> (i32, i32) {
    %c0_i32 = arith.constant 0 : i32
    %c0_i32_0 = arith.constant 0 : i32
    %c0_i32_1 = arith.constant 0 : i32
    return %c0_i32, %c0_i32_0 : i32, i32
  }
  func.func @transform_5(%arg0: i32) -> (i32, i32) {
    %c0_i32 = arith.constant 0 : i32
    %c0_i32_0 = arith.constant 0 : i32
    return %arg0, %c0_i32 : i32, i32
  }
}

</mosaic_0001>

<llo_original>
// kernel: _forward_impl.1
$region0: #{_forward_impl.1}
  #allocation0 [shape = 'u32[]', space=smem, size = 0x4, offset = 0x4, fixed_abs, tag = 'smem constant byte address 0x4 - core index']
  #allocation1 [shape = 'u32[144,128]{1,0:T(1,128)}', space=vmem, size = 0x12000, scoped, tag = 'internal scratch']
  %s0 = inlined_call_operand.hbm [shape: f32[16,784], index: 0, kind: input, shape index: {}]
  %s1 = inlined_call_operand.hbm [shape: bf16[784,512], index: 1, kind: input, shape index: {}]
  %s2 = inlined_call_operand.hbm [shape: f32[1,512], index: 2, kind: input, shape index: {}]
  %s3 = inlined_call_operand.hbm [shape: bf16[512,128], index: 3, kind: input, shape index: {}]
  %s4 = inlined_call_operand.vmem [shape: f32[1,128], index: 4, kind: input, shape index: {}]
  %s5 = inlined_call_operand.hbm [shape: f32[16,128], index: 5, kind: output, shape index: {}]
  %s6 = sld [smem:[#allocation0]]
  $region46: #{_forward_impl.1} parent=0
    _
  %s8 = ssub.s32 1, %s6
  %s9 = scalar_select 0, %s8, %s6
  $region1: #{_forward_impl.1} parent=0
    #allocation2 [shape = 'u8[57344]{0}', space=vmem, size = 0xe000, scoped, tag = 'input window, operand 0, single buffered']
    #allocation3 [shape = 's32[1]{0}', space=sflag, size = 0x4, scoped, tag = 'scoped memory for _forward_impl.1']
    #allocation4 [shape = 's32[1]{0}', space=sflag, size = 0x4, scoped, tag = 'scoped memory for _forward_impl.1']
    #allocation5 [shape = 'u8[802816]{0}', space=vmem, size = 0xc4000, scoped, tag = 'input window, operand 1, single buffered']
    #allocation6 [shape = 's32[1]{0}', space=sflag, size = 0x4, scoped, tag = 'scoped memory for _forward_impl.1']
    #allocation7 [shape = 'u8[2048]{0}', space=vmem, size = 0x800, scoped, tag = 'input window, operand 2, single buffered']
    #allocation8 [shape = 'u8[131072]{0}', space=vmem, size = 0x20000, scoped, tag = 'input window, operand 3, single buffered']
    #allocation9 [shape = 's32[1]{0}', space=sflag, size = 0x4, scoped, tag = 'scoped memory for _forward_impl.1']
    #allocation10 [shape = 'u8[8192]{0}', space=vmem, size = 0x2000, scoped, tag = 'output window, operand 0, single buffered']
    %10 = vsyncpa [#allocation3], 0
    %11 = vsyncpa [#allocation6], 0
    %12 = vsyncpa [#allocation9], 0
    %13 = vsyncpa [#allocation4], 0
    // Predicated region
    $region2: #{_forward_impl.1} parent=1 // pred_check
      _
    $region3: #{_forward_impl.1} parent=1 // pred_check_branch
      %15 = sbr.rel (0) target = $region5
    $region4: #{_forward_impl.1} parent=1 // pred_region
      %s17 = ssub.s32 1792, 1792
      %18 = vsyncadd [#allocation3], %s17
      %s19 = sshll.u32 [#allocation2], 4
      %s20 = int_to_ptr.vmem [resolvable:$true] %s19
      %25 = dma.hbm_to_vmem [thread:$0]  %s0, 1792, %s20, [#allocation3], 896, 896, 56
    $region5: #{_forward_impl.1} parent=1 // pred_fallthru
      _
    // Predicated region
    $region6: #{_forward_impl.1} parent=1 // pred_check
      _
    $region7: #{_forward_impl.1} parent=1 // pred_check_branch
      %27 = sbr.rel (0) target = $region9
    $region8: #{_forward_impl.1} parent=1 // pred_region
      %s29 = ssub.s32 25088, 25088
      %30 = vsyncadd [#allocation6], %s29
      %s31 = sshll.u32 [#allocation5], 4
      %s32 = int_to_ptr.vmem [resolvable:$true] %s31
      %37 = dma.hbm_to_vmem [thread:$0]  %s1, 25088, %s32, [#allocation6], 256, 256, 16
    $region9: #{_forward_impl.1} parent=1 // pred_fallthru
      _
    // Predicated region
    $region10: #{_forward_impl.1} parent=1 // pred_check
      _
    $region11: #{_forward_impl.1} parent=1 // pred_check_branch
      %39 = sbr.rel (0) target = $region13
    $region12: #{_forward_impl.1} parent=1 // pred_region
      %s41 = ssub.s32 64, 64
      %42 = vsyncadd [#allocation6], %s41
      %s44 = sshll.u32 [#allocation7], 4
      %s45 = int_to_ptr.vmem [resolvable:$true] %s44
      %47 = dma.hbm_to_vmem [thread:$0]  %s2, 64, %s45, [#allocation6]
    $region13: #{_forward_impl.1} parent=1 // pred_fallthru
      _
    // Predicated region
    $region14: #{_forward_impl.1} parent=1 // pred_check
      _
    $region15: #{_forward_impl.1} parent=1 // pred_check_branch
      %49 = sbr.rel (0) target = $region17
    $region16: #{_forward_impl.1} parent=1 // pred_region
      %s51 = ssub.s32 4096, 4096
      %52 = vsyncadd [#allocation9], %s51
      %s53 = sshll.u32 [#allocation8], 4
      %s54 = int_to_ptr.vmem [resolvable:$true] %s53
      %59 = dma.hbm_to_vmem [thread:$0]  %s3, 4096, %s54, [#allocation9], 64, 64, 4
    $region17: #{_forward_impl.1} parent=1 // pred_fallthru
      _
    // Predicated region
    $region18: #{_forward_impl.1} parent=1 // pred_check
      _
    $region19: #{_forward_impl.1} parent=1 // pred_check_branch
      %61 = sbr.rel (0) target = $region21
    $region20: #{_forward_impl.1} parent=1 // pred_region
      _
    $region21: #{_forward_impl.1} parent=1 // pred_fallthru
      _
    // Predicated region
    $region22: #{_forward_impl.1} parent=1 // pred_check
      _
    $region23: #{_forward_impl.1} parent=1 // pred_check_branch
      %63 = sbr.rel (0) target = $region25
    $region24: #{_forward_impl.1} parent=1 // pred_region
      %64 = dma.done [#allocation3], 1792
    $region25: #{_forward_impl.1} parent=1 // pred_fallthru
      _
    // Predicated region
    $region26: #{_forward_impl.1} parent=1 // pred_check
      _
    $region27: #{_forward_impl.1} parent=1 // pred_check_branch
      %66 = sbr.rel (0) target = $region29
    $region28: #{_forward_impl.1} parent=1 // pred_region
      %67 = dma.done [#allocation6], 25088
    $region29: #{_forward_impl.1} parent=1 // pred_fallthru
      _
    // Predicated region
    $region30: #{_forward_impl.1} parent=1 // pred_check
      _
    $region31: #{_forward_impl.1} parent=1 // pred_check_branch
      %69 = sbr.rel (0) target = $region33
    $region32: #{_forward_impl.1} parent=1 // pred_region
      %70 = dma.done [#allocation6], 64
    $region33: #{_forward_impl.1} parent=1 // pred_fallthru
      _
    // Predicated region
    $region34: #{_forward_impl.1} parent=1 // pred_check
      _
    $region35: #{_forward_impl.1} parent=1 // pred_check_branch
      %72 = sbr.rel (0) target = $region37
    $region36: #{_forward_impl.1} parent=1 // pred_region
      %73 = dma.done [#allocation9], 4096
    $region37: #{_forward_impl.1} parent=1 // pred_fallthru
      _
    %v75 = vld [vmem:[#allocation2] sm:$0xff]
    %v76 = vld [vmem:[#allocation2 + $0x8] sm:$0xff]
    %v77 = vld [vmem:[#allocation2 + $0x10] sm:$0xff]
    %v78 = vld [vmem:[#allocation2 + $0x18] sm:$0xff]
    %v79 = vld [vmem:[#allocation2 + $0x20] sm:$0xff]
    %v80 = vld [vmem:[#allocation2 + $0x28] sm:$0xff]
    %v81 = vld [vmem:[#allocation2 + $0x30] sm:$0xff]
    %v82 = vld [vmem:[#allocation2 + $0x38] sm:$0xff]
    %v83 = vld [vmem:[#allocation2 + $0x40] sm:$0xff]
    %v84 = vld [vmem:[#allocation2 + $0x48] sm:$0xff]
    %v85 = vld [vmem:[#allocation2 + $0x50] sm:$0xff]
    %v86 = vld [vmem:[#allocation2 + $0x58] sm:$0xff]
    %v87 = vld [vmem:[#allocation2 + $0x60] sm:$0xff]
    %v88 = vld [vmem:[#allocation2 + $0x68] sm:$0xff]
    %v89 = vpack.c.bf16 %v82, %v75
    %v90 = vpack.c.bf16 %v83, %v76
    %v91 = vpack.c.bf16 %v84, %v77
    %v92 = vpack.c.bf16 %v85, %v78
    %v93 = vpack.c.bf16 %v86, %v79
    %v94 = vpack.c.bf16 %v87, %v80
    %v95 = vpack.c.bf16 %v88, %v81
    %v96 = vld [vmem:[#allocation5] sm:$0xff]
    %v97 = vld [vmem:[#allocation5 + $0x8] sm:$0xff]
    %v98 = vld [vmem:[#allocation5 + $0x10] sm:$0xff]
    %v99 = vld [vmem:[#allocation5 + $0x18] sm:$0xff]
    %v100 = vld [vmem:[#allocation5 + $0x20] sm:$0xff]
    %v101 = vld [vmem:[#allocation5 + $0x28] sm:$0xff]
    %v102 = vld [vmem:[#allocation5 + $0x30] sm:$0xff]
    %v103 = vld [vmem:[#allocation5 + $0x38] sm:$0xff]
    %v104 = vld [vmem:[#allocation5 + $0x40] sm:$0xff]
    %v105 = vld [vmem:[#allocation5 + $0x48] sm:$0xff]
    %v106 = vld [vmem:[#allocation5 + $0x50] sm:$0xff]
    %v107 = vld [vmem:[#allocation5 + $0x58] sm:$0xff]
    %v108 = vld [vmem:[#allocation5 + $0x60] sm:$0xff]
    %v109 = vld [vmem:[#allocation5 + $0x68] sm:$0xff]
    %v110 = vld [vmem:[#allocation5 + $0x70] sm:$0xff]
    %v111 = vld [vmem:[#allocation5 + $0x78] sm:$0xff]
    %v112 = vld [vmem:[#allocation5 + $0x80] sm:$0xff]
    %v113 = vld [vmem:[#allocation5 + $0x88] sm:$0xff]
    %v114 = vld [vmem:[#allocation5 + $0x90] sm:$0xff]
    %v115 = vld [vmem:[#allocation5 + $0x98] sm:$0xff]
    %v116 = vld [vmem:[#allocation5 + $0xa0] sm:$0xff]
    %v117 = vld [vmem:[#allocation5 + $0xa8] sm:$0xff]
    %v118 = vld [vmem:[#allocation5 + $0xb0] sm:$0xff]
    %v119 = vld [vmem:[#allocation5 + $0xb8] sm:$0xff]
    %v120 = vld [vmem:[#allocation5 + $0xc0] sm:$0xff]
    %v121 = vld [vmem:[#allocation5 + $0xc8] sm:$0xff]
    %v122 = vld [vmem:[#allocation5 + $0xd0] sm:$0xff]
    %v123 = vld [vmem:[#allocation5 + $0xd8] sm:$0xff]
    %v124 = vld [vmem:[#allocation5 + $0xe0] sm:$0xff]
    %v125 = vld [vmem:[#allocation5 + $0xe8] sm:$0xff]
    %v126 = vld [vmem:[#allocation5 + $0xf0] sm:$0xff]
    %v127 = vld [vmem:[#allocation5 + $0xf8] sm:$0xff]
    %v128 = vld [vmem:[#allocation5 + $0x100] sm:$0xff]
    %v129 = vld [vmem:[#allocation5 + $0x108] sm:$0xff]
    %v130 = vld [vmem:[#allocation5 + $0x110] sm:$0xff]
    %v131 = vld [vmem:[#allocation5 + $0x118] sm:$0xff]
    %v132 = vld [vmem:[#allocation5 + $0x120] sm:$0xff]
    %v133 = vld [vmem:[#allocation5 + $0x128] sm:$0xff]
    %v134 = vld [vmem:[#allocation5 + $0x130] sm:$0xff]
    %v135 = vld [vmem:[#allocation5 + $0x138] sm:$0xff]
    %v136 = vld [vmem:[#allocation5 + $0x140] sm:$0xff]
    %v137 = vld [vmem:[#allocation5 + $0x148] sm:$0xff]
    %v138 = vld [vmem:[#allocation5 + $0x150] sm:$0xff]
    %v139 = vld [vmem:[#allocation5 + $0x158] sm:$0xff]
    %v140 = vld [vmem:[#allocation5 + $0x160] sm:$0xff]
    %v141 = vld [vmem:[#allocation5 + $0x168] sm:$0xff]
    %v142 = vld [vmem:[#allocation5 + $0x170] sm:$0xff]
    %v143 = vld [vmem:[#allocation5 + $0x178] sm:$0xff]
    %v144 = vld [vmem:[#allocation5 + $0x180] sm:$0xff]
    %v145 = vld [vmem:[#allocation5 + $0x188] sm:$0xff]
    %v146 = vld [vmem:[#allocation5 + $0x190] sm:$0xff]
    %v147 = vld [vmem:[#allocation5 + $0x198] sm:$0xff]
    %v148 = vld [vmem:[#allocation5 + $0x1a0] sm:$0xff]
    %v149 = vld [vmem:[#allocation5 + $0x1a8] sm:$0xff]
    %v150 = vld [vmem:[#allocation5 + $0x1b0] sm:$0xff]
    %v151 = vld [vmem:[#allocation5 + $0x1b8] sm:$0xff]
    %v152 = vld [vmem:[#allocation5 + $0x1c0] sm:$0xff]
    %v153 = vld [vmem:[#allocation5 + $0x1c8] sm:$0xff]
    %v154 = vld [vmem:[#allocation5 + $0x1d0] sm:$0xff]
    %v155 = vld [vmem:[#allocation5 + $0x1d8] sm:$0xff]
    %v156 = vld [vmem:[#allocation5 + $0x1e0] sm:$0xff]
    %v157 = vld [vmem:[#allocation5 + $0x1e8] sm:$0xff]
    %v158 = vld [vmem:[#allocation5 + $0x1f0] sm:$0xff]
    %v159 = vld [vmem:[#allocation5 + $0x1f8] sm:$0xff]
    %v160 = vld [vmem:[#allocation5 + $0x200] sm:$0xff]
    %v161 = vld [vmem:[#allocation5 + $0x208] sm:$0xff]
    %v162 = vld [vmem:[#allocation5 + $0x210] sm:$0xff]
    %v163 = vld [vmem:[#allocation5 + $0x218] sm:$0xff]
    %v164 = vld [vmem:[#allocation5 + $0x220] sm:$0xff]
    %v165 = vld [vmem:[#allocation5 + $0x228] sm:$0xff]
    %v166 = vld [vmem:[#allocation5 + $0x230] sm:$0xff]
    %v167 = vld [vmem:[#allocation5 + $0x238] sm:$0xff]
    %v168 = vld [vmem:[#allocation5 + $0x240] sm:$0xff]
    %v169 = vld [vmem:[#allocation5 + $0x248] sm:$0xff]
    %v170 = vld [vmem:[#allocation5 + $0x250] sm:$0xff]
    %v171 = vld [vmem:[#allocation5 + $0x258] sm:$0xff]
    %v172 = vld [vmem:[#allocation5 + $0x260] sm:$0xff]
    %v173 = vld [vmem:[#allocation5 + $0x268] sm:$0xff]
    %v174 = vld [vmem:[#allocation5 + $0x270] sm:$0xff]
    %v175 = vld [vmem:[#allocation5 + $0x278] sm:$0xff]
    %v176 = vld [vmem:[#allocation5 + $0x280] sm:$0xff]
    %v177 = vld [vmem:[#allocation5 + $0x288] sm:$0xff]
    %v178 = vld [vmem:[#allocation5 + $0x290] sm:$0xff]
    %v179 = vld [vmem:[#allocation5 + $0x298] sm:$0xff]
    %v180 = vld [vmem:[#allocation5 + $0x2a0] sm:$0xff]
    %v181 = vld [vmem:[#allocation5 + $0x2a8] sm:$0xff]
    %v182 = vld [vmem:[#allocation5 + $0x2b0] sm:$0xff]
    %v183 = vld [vmem:[#allocation5 + $0x2b8] sm:$0xff]
    %v184 = vld [vmem:[#allocation5 + $0x2c0] sm:$0xff]
    %v185 = vld [vmem:[#allocation5 + $0x2c8] sm:$0xff]
    %v186 = vld [vmem:[#allocation5 + $0x2d0] sm:$0xff]
    %v187 = vld [vmem:[#allocation5 + $0x2d8] sm:$0xff]
    %v188 = vld [vmem:[#allocation5 + $0x2e0] sm:$0xff]
    %v189 = vld [vmem:[#allocation5 + $0x2e8] sm:$0xff]
    %v190 = vld [vmem:[#allocation5 + $0x2f0] sm:$0xff]
    %v191 = vld [vmem:[#allocation5 + $0x2f8] sm:$0xff]
    %v192 = vld [vmem:[#allocation5 + $0x300] sm:$0xff]
    %v193 = vld [vmem:[#allocation5 + $0x308] sm:$0xff]
    %v194 = vld [vmem:[#allocation5 + $0x310] sm:$0xff]
    %v195 = vld [vmem:[#allocation5 + $0x318] sm:$0xff]
    %v196 = vld [vmem:[#allocation5 + $0x320] sm:$0xff]
    %v197 = vld [vmem:[#allocation5 + $0x328] sm:$0xff]
    %v198 = vld [vmem:[#allocation5 + $0x330] sm:$0xff]
    %v199 = vld [vmem:[#allocation5 + $0x338] sm:$0xff]
    %v200 = vld [vmem:[#allocation5 + $0x340] sm:$0xff]
    %v201 = vld [vmem:[#allocation5 + $0x348] sm:$0xff]
    %v202 = vld [vmem:[#allocation5 + $0x350] sm:$0xff]
    %v203 = vld [vmem:[#allocation5 + $0x358] sm:$0xff]
    %v204 = vld [vmem:[#allocation5 + $0x360] sm:$0xff]
    %v205 = vld [vmem:[#allocation5 + $0x368] sm:$0xff]
    %v206 = vld [vmem:[#allocation5 + $0x370] sm:$0xff]
    %v207 = vld [vmem:[#allocation5 + $0x378] sm:$0xff]
    %v208 = vld [vmem:[#allocation5 + $0x380] sm:$0xff]
    %v209 = vld [vmem:[#allocation5 + $0x388] sm:$0xff]
    %v210 = vld [vmem:[#allocation5 + $0x390] sm:$0xff]
    %v211 = vld [vmem:[#allocation5 + $0x398] sm:$0xff]
    %v212 = vld [vmem:[#allocation5 + $0x3a0] sm:$0xff]
    %v213 = vld [vmem:[#allocation5 + $0x3a8] sm:$0xff]
    %v214 = vld [vmem:[#allocation5 + $0x3b0] sm:$0xff]
    %v215 = vld [vmem:[#allocation5 + $0x3b8] sm:$0xff]
    %v216 = vld [vmem:[#allocation5 + $0x3c0] sm:$0xff]
    %v217 = vld [vmem:[#allocation5 + $0x3c8] sm:$0xff]
    %v218 = vld [vmem:[#allocation5 + $0x3d0] sm:$0xff]
    %v219 = vld [vmem:[#allocation5 + $0x3d8] sm:$0xff]
    %v220 = vld [vmem:[#allocation5 + $0x3e0] sm:$0xff]
    %v221 = vld [vmem:[#allocation5 + $0x3e8] sm:$0xff]
    %v222 = vld [vmem:[#allocation5 + $0x3f0] sm:$0xff]
    %v223 = vld [vmem:[#allocation5 + $0x3f8] sm:$0xff]
    %v224 = vld [vmem:[#allocation5 + $0x400] sm:$0xff]
    %v225 = vld [vmem:[#allocation5 + $0x408] sm:$0xff]
    %v226 = vld [vmem:[#allocation5 + $0x410] sm:$0xff]
    %v227 = vld [vmem:[#allocation5 + $0x418] sm:$0xff]
    %v228 = vld [vmem:[#allocation5 + $0x420] sm:$0xff]
    %v229 = vld [vmem:[#allocation5 + $0x428] sm:$0xff]
    %v230 = vld [vmem:[#allocation5 + $0x430] sm:$0xff]
    %v231 = vld [vmem:[#allocation5 + $0x438] sm:$0xff]
    %v232 = vld [vmem:[#allocation5 + $0x440] sm:$0xff]
    %v233 = vld [vmem:[#allocation5 + $0x448] sm:$0xff]
    %v234 = vld [vmem:[#allocation5 + $0x450] sm:$0xff]
    %v235 = vld [vmem:[#allocation5 + $0x458] sm:$0xff]
    %v236 = vld [vmem:[#allocation5 + $0x460] sm:$0xff]
    %v237 = vld [vmem:[#allocation5 + $0x468] sm:$0xff]
    %v238 = vld [vmem:[#allocation5 + $0x470] sm:$0xff]
    %v239 = vld [vmem:[#allocation5 + $0x478] sm:$0xff]
    %v240 = vld [vmem:[#allocation5 + $0x480] sm:$0xff]
    %v241 = vld [vmem:[#allocation5 + $0x488] sm:$0xff]
    %v242 = vld [vmem:[#allocation5 + $0x490] sm:$0xff]
    %v243 = vld [vmem:[#allocation5 + $0x498] sm:$0xff]
    %v244 = vld [vmem:[#allocation5 + $0x4a0] sm:$0xff]
    %v245 = vld [vmem:[#allocation5 + $0x4a8] sm:$0xff]
    %v246 = vld [vmem:[#allocation5 + $0x4b0] sm:$0xff]
    %v247 = vld [vmem:[#allocation5 + $0x4b8] sm:$0xff]
    %v248 = vld [vmem:[#allocation5 + $0x4c0] sm:$0xff]
    %v249 = vld [vmem:[#allocation5 + $0x4c8] sm:$0xff]
    %v250 = vld [vmem:[#allocation5 + $0x4d0] sm:$0xff]
    %v251 = vld [vmem:[#allocation5 + $0x4d8] sm:$0xff]
    %v252 = vld [vmem:[#allocation5 + $0x4e0] sm:$0xff]
    %v253 = vld [vmem:[#allocation5 + $0x4e8] sm:$0xff]
    %v254 = vld [vmem:[#allocation5 + $0x4f0] sm:$0xff]
    %v255 = vld [vmem:[#allocation5 + $0x4f8] sm:$0xff]
    %v256 = vld [vmem:[#allocation5 + $0x500] sm:$0xff]
    %v257 = vld [vmem:[#allocation5 + $0x508] sm:$0xff]
    %v258 = vld [vmem:[#allocation5 + $0x510] sm:$0xff]
    %v259 = vld [vmem:[#allocation5 + $0x518] sm:$0xff]
    %v260 = vld [vmem:[#allocation5 + $0x520] sm:$0xff]
    %v261 = vld [vmem:[#allocation5 + $0x528] sm:$0xff]
    %v262 = vld [vmem:[#allocation5 + $0x530] sm:$0xff]
    %v263 = vld [vmem:[#allocation5 + $0x538] sm:$0xff]
    %v264 = vld [vmem:[#allocation5 + $0x540] sm:$0xff]
    %v265 = vld [vmem:[#allocation5 + $0x548] sm:$0xff]
    %v266 = vld [vmem:[#allocation5 + $0x550] sm:$0xff]
    %v267 = vld [vmem:[#allocation5 + $0x558] sm:$0xff]
    %v268 = vld [vmem:[#allocation5 + $0x560] sm:$0xff]
    %v269 = vld [vmem:[#allocation5 + $0x568] sm:$0xff]
    %v270 = vld [vmem:[#allocation5 + $0x570] sm:$0xff]
    %v271 = vld [vmem:[#allocation5 + $0x578] sm:$0xff]
    %v272 = vld [vmem:[#allocation5 + $0x580] sm:$0xff]
    %v273 = vld [vmem:[#allocation5 + $0x588] sm:$0xff]
    %v274 = vld [vmem:[#allocation5 + $0x590] sm:$0xff]
    %v275 = vld [vmem:[#allocation5 + $0x598] sm:$0xff]
    %v276 = vld [vmem:[#allocation5 + $0x5a0] sm:$0xff]
    %v277 = vld [vmem:[#allocation5 + $0x5a8] sm:$0xff]
    %v278 = vld [vmem:[#allocation5 + $0x5b0] sm:$0xff]
    %v279 = vld [vmem:[#allocation5 + $0x5b8] sm:$0xff]
    %v280 = vld [vmem:[#allocation5 + $0x5c0] sm:$0xff]
    %v281 = vld [vmem:[#allocation5 + $0x5c8] sm:$0xff]
    %v282 = vld [vmem:[#allocation5 + $0x5d0] sm:$0xff]
    %v283 = vld [vmem:[#allocation5 + $0x5d8] sm:$0xff]
    %v284 = vld [vmem:[#allocation5 + $0x5e0] sm:$0xff]
    %v285 = vld [vmem:[#allocation5 + $0x5e8] sm:$0xff]
    %v286 = vld [vmem:[#allocation5 + $0x5f0] sm:$0xff]
    %v287 = vld [vmem:[#allocation5 + $0x5f8] sm:$0xff]
    %v288 = vld [vmem:[#allocation5 + $0x600] sm:$0xff]
    %v289 = vld [vmem:[#allocation5 + $0x608] sm:$0xff]
    %v290 = vld [vmem:[#allocation5 + $0x610] sm:$0xff]
    %v291 = vld [vmem:[#allocation5 + $0x618] sm:$0xff]
    %v292 = vld [vmem:[#allocation7] sm:$0xf]
    %v294 = vlaneseq
    %v295 = vshrl.u32 %v294, 7
    %v296 = vsub.s32 0, %v295
    %v297 = vrot.slane %v292, %v296
    %v298 = vlaneseq
    %v299 = vshrl.u32 %v298, 7
    %v300 = vsub.s32 1, %v299
    %v301 = vrot.slane %v292, %v300
    %v302 = vlaneseq
    %v303 = vshrl.u32 %v302, 7
    %v304 = vsub.s32 2, %v303
    %v305 = vrot.slane %v292, %v304
    %v306 = vlaneseq
    %v307 = vshrl.u32 %v306, 7
    %v308 = vsub.s32 3, %v307
    %v309 = vrot.slane %v292, %v308
    %v510 = vunpack.c.l.b16 %v96
    %v511 = vunpack.c.h.b16 %v96
    %v512 = vunpack.c.l.b16 %v97
    %v513 = vunpack.c.h.b16 %v97
    %v514 = vunpack.c.l.b16 %v98
    %v515 = vunpack.c.h.b16 %v98
    %v516 = vunpack.c.l.b16 %v99
    %v517 = vunpack.c.h.b16 %v99
    %v518 = vunpack.c.l.b16 %v100
    %v519 = vunpack.c.h.b16 %v100
    %v520 = vunpack.c.l.b16 %v101
    %v521 = vunpack.c.h.b16 %v101
    %v522 = vunpack.c.l.b16 %v102
    %v523 = vunpack.c.h.b16 %v102
    %v524 = vunpack.c.l.b16 %v103
    %v525 = vunpack.c.h.b16 %v103
    %v526 = vunpack.c.l.b16 %v104
    %v527 = vunpack.c.h.b16 %v104
    %v528 = vunpack.c.l.b16 %v105
    %v529 = vunpack.c.h.b16 %v105
    %v530 = vunpack.c.l.b16 %v106
    %v531 = vunpack.c.h.b16 %v106
    %v532 = vunpack.c.l.b16 %v107
    %v533 = vunpack.c.h.b16 %v107
    %v534 = vunpack.c.l.b16 %v108
    %v535 = vunpack.c.h.b16 %v108
    %v536 = vunpack.c.l.b16 %v109
    %v537 = vunpack.c.h.b16 %v109
    %v538 = vunpack.c.l.b16 %v110
    %v539 = vunpack.c.h.b16 %v110
    %v540 = vunpack.c.l.b16 %v111
    %v541 = vunpack.c.h.b16 %v111
    %v542 = vunpack.c.l.b16 %v112
    %v543 = vunpack.c.h.b16 %v112
    %v544 = vunpack.c.l.b16 %v113
    %v545 = vunpack.c.h.b16 %v113
    %v546 = vunpack.c.l.b16 %v114
    %v547 = vunpack.c.h.b16 %v114
    %v548 = vunpack.c.l.b16 %v115
    %v549 = vunpack.c.h.b16 %v115
    %v550 = vunpack.c.l.b16 %v116
    %v551 = vunpack.c.h.b16 %v116
    %v552 = vunpack.c.l.b16 %v117
    %v553 = vunpack.c.h.b16 %v117
    %v554 = vunpack.c.l.b16 %v118
    %v555 = vunpack.c.h.b16 %v118
    %v556 = vunpack.c.l.b16 %v119
    %v557 = vunpack.c.h.b16 %v119
    %v558 = vunpack.c.l.b16 %v120
    %v559 = vunpack.c.h.b16 %v120
    %v560 = vunpack.c.l.b16 %v121
    %v561 = vunpack.c.h.b16 %v121
    %v562 = vunpack.c.l.b16 %v122
    %v563 = vunpack.c.h.b16 %v122
    %v564 = vunpack.c.l.b16 %v123
    %v565 = vunpack.c.h.b16 %v123
    %v566 = vunpack.c.l.b16 %v124
    %v567 = vunpack.c.h.b16 %v124
    %v568 = vunpack.c.l.b16 %v125
    %v569 = vunpack.c.h.b16 %v125
    %v570 = vunpack.c.l.b16 %v126
    %v571 = vunpack.c.h.b16 %v126
    %v572 = vunpack.c.l.b16 %v127
    %v573 = vunpack.c.h.b16 %v127
    %v574 = vunpack.c.l.b16 %v128
    %v575 = vunpack.c.h.b16 %v128
    %v576 = vunpack.c.l.b16 %v129
    %v577 = vunpack.c.h.b16 %v129
    %v578 = vunpack.c.l.b16 %v130
    %v579 = vunpack.c.h.b16 %v130
    %v580 = vunpack.c.l.b16 %v131
    %v581 = vunpack.c.h.b16 %v131
    %v582 = vunpack.c.l.b16 %v132
    %v583 = vunpack.c.h.b16 %v132
    %v584 = vunpack.c.l.b16 %v133
    %v585 = vunpack.c.h.b16 %v133
    %v586 = vunpack.c.l.b16 %v134
    %v587 = vunpack.c.h.b16 %v134
    %v588 = vunpack.c.l.b16 %v135
    %v589 = vunpack.c.h.b16 %v135
    %v590 = vunpack.c.l.b16 %v136
    %v591 = vunpack.c.h.b16 %v136
    %v592 = vunpack.c.l.b16 %v137
    %v593 = vunpack.c.h.b16 %v137
    %v594 = vunpack.c.l.b16 %v138
    %v595 = vunpack.c.h.b16 %v138
    %v596 = vunpack.c.l.b16 %v139
    %v597 = vunpack.c.h.b16 %v139
    %v598 = vunpack.c.l.b16 %v140
    %v599 = vunpack.c.h.b16 %v140
    %v600 = vunpack.c.l.b16 %v141
    %v601 = vunpack.c.h.b16 %v141
    %v602 = vunpack.c.l.b16 %v142
    %v603 = vunpack.c.h.b16 %v142
    %v604 = vunpack.c.l.b16 %v143
    %v605 = vunpack.c.h.b16 %v143
    %v606 = vunpack.c.l.b16 %v144
    %v607 = vunpack.c.h.b16 %v144
    %v608 = vunpack.c.l.b16 %v145
    %v609 = vunpack.c.h.b16 %v145
    %v610 = vunpack.c.l.b16 %v146
    %v611 = vunpack.c.h.b16 %v146
    %v612 = vunpack.c.l.b16 %v147
    %v613 = vunpack.c.h.b16 %v147
    %v614 = vunpack.c.l.b16 %v148
    %v615 = vunpack.c.h.b16 %v148
    %v616 = vunpack.c.l.b16 %v149
    %v617 = vunpack.c.h.b16 %v149
    %v618 = vunpack.c.l.b16 %v150
    %v619 = vunpack.c.h.b16 %v150
    %v620 = vunpack.c.l.b16 %v151
    %v621 = vunpack.c.h.b16 %v151
    %v622 = vunpack.c.l.b16 %v152
    %v623 = vunpack.c.h.b16 %v152
    %v624 = vunpack.c.l.b16 %v153
    %v625 = vunpack.c.h.b16 %v153
    %v626 = vunpack.c.l.b16 %v154
    %v627 = vunpack.c.h.b16 %v154
    %v628 = vunpack.c.l.b16 %v155
    %v629 = vunpack.c.h.b16 %v155
    %v630 = vunpack.c.l.b16 %v156
    %v631 = vunpack.c.h.b16 %v156
    %v632 = vunpack.c.l.b16 %v157
    %v633 = vunpack.c.h.b16 %v157
    %v634 = vunpack.c.l.b16 %v158
    %v635 = vunpack.c.h.b16 %v158
    %v636 = vunpack.c.l.b16 %v159
    %v637 = vunpack.c.h.b16 %v159
    %v638 = vunpack.c.l.b16 %v160
    %v639 = vunpack.c.h.b16 %v160
    %v640 = vunpack.c.l.b16 %v161
    %v641 = vunpack.c.h.b16 %v161
    %v642 = vunpack.c.l.b16 %v162
    %v643 = vunpack.c.h.b16 %v162
    %v644 = vunpack.c.l.b16 %v163
    %v645 = vunpack.c.h.b16 %v163
    %v646 = vunpack.c.l.b16 %v164
    %v647 = vunpack.c.h.b16 %v164
    %v648 = vunpack.c.l.b16 %v165
    %v649 = vunpack.c.h.b16 %v165
    %v650 = vunpack.c.l.b16 %v166
    %v651 = vunpack.c.h.b16 %v166
    %v652 = vunpack.c.l.b16 %v167
    %v653 = vunpack.c.h.b16 %v167
    %v654 = vunpack.c.l.b16 %v168
    %v655 = vunpack.c.h.b16 %v168
    %v656 = vunpack.c.l.b16 %v169
    %v657 = vunpack.c.h.b16 %v169
    %v658 = vunpack.c.l.b16 %v170
    %v659 = vunpack.c.h.b16 %v170
    %v660 = vunpack.c.l.b16 %v171
    %v661 = vunpack.c.h.b16 %v171
    %v662 = vunpack.c.l.b16 %v172
    %v663 = vunpack.c.h.b16 %v172
    %v664 = vunpack.c.l.b16 %v173
    %v665 = vunpack.c.h.b16 %v173
    %v666 = vunpack.c.l.b16 %v174
    %v667 = vunpack.c.h.b16 %v174
    %v668 = vunpack.c.l.b16 %v175
    %v669 = vunpack.c.h.b16 %v175
    %v670 = vunpack.c.l.b16 %v176
    %v671 = vunpack.c.h.b16 %v176
    %v672 = vunpack.c.l.b16 %v177
    %v673 = vunpack.c.h.b16 %v177
    %v674 = vunpack.c.l.b16 %v178
    %v675 = vunpack.c.h.b16 %v178
    %v676 = vunpack.c.l.b16 %v179
    %v677 = vunpack.c.h.b16 %v179
    %v678 = vunpack.c.l.b16 %v180
    %v679 = vunpack.c.h.b16 %v180
    %v680 = vunpack.c.l.b16 %v181
    %v681 = vunpack.c.h.b16 %v181
    %v682 = vunpack.c.l.b16 %v182
    %v683 = vunpack.c.h.b16 %v182
    %v684 = vunpack.c.l.b16 %v183
    %v685 = vunpack.c.h.b16 %v183
    %v686 = vunpack.c.l.b16 %v184
    %v687 = vunpack.c.h.b16 %v184
    %v688 = vunpack.c.l.b16 %v185
    %v689 = vunpack.c.h.b16 %v185
    %v690 = vunpack.c.l.b16 %v186
    %v691 = vunpack.c.h.b16 %v186
    %v692 = vunpack.c.l.b16 %v187
    %v693 = vunpack.c.h.b16 %v187
    %v694 = vunpack.c.l.b16 %v188
    %v695 = vunpack.c.h.b16 %v188
    %v696 = vunpack.c.l.b16 %v189
    %v697 = vunpack.c.h.b16 %v189
    %v698 = vunpack.c.l.b16 %v190
    %v699 = vunpack.c.h.b16 %v190
    %v700 = vunpack.c.l.b16 %v191
    %v701 = vunpack.c.h.b16 %v191
    %v702 = vunpack.c.l.b16 %v192
    %v703 = vunpack.c.h.b16 %v192
    %v704 = vunpack.c.l.b16 %v193
    %v705 = vunpack.c.h.b16 %v193
    %v706 = vunpack.c.l.b16 %v194
    %v707 = vunpack.c.h.b16 %v194
    %v708 = vunpack.c.l.b16 %v195
    %v709 = vunpack.c.h.b16 %v195
    %v710 = vunpack.c.l.b16 %v196
    %v711 = vunpack.c.h.b16 %v196
    %v712 = vunpack.c.l.b16 %v197
    %v713 = vunpack.c.h.b16 %v197
    %v714 = vunpack.c.l.b16 %v198
    %v715 = vunpack.c.h.b16 %v198
    %v716 = vunpack.c.l.b16 %v199
    %v717 = vunpack.c.h.b16 %v199
    %v718 = vunpack.c.l.b16 %v200
    %v719 = vunpack.c.h.b16 %v200
    %v720 = vunpack.c.l.b16 %v201
    %v721 = vunpack.c.h.b16 %v201
    %v722 = vunpack.c.l.b16 %v202
    %v723 = vunpack.c.h.b16 %v202
    %v724 = vunpack.c.l.b16 %v203
    %v725 = vunpack.c.h.b16 %v203
    %v726 = vunpack.c.l.b16 %v204
    %v727 = vunpack.c.h.b16 %v204
    %v728 = vunpack.c.l.b16 %v205
    %v729 = vunpack.c.h.b16 %v205
    %v730 = vunpack.c.l.b16 %v206
    %v731 = vunpack.c.h.b16 %v206
    %v732 = vunpack.c.l.b16 %v207
    %v733 = vunpack.c.h.b16 %v207
    %v734 = vunpack.c.l.b16 %v208
    %v735 = vunpack.c.h.b16 %v208
    %v736 = vunpack.c.l.b16 %v209
    %v737 = vunpack.c.h.b16 %v209
    %v738 = vunpack.c.l.b16 %v210
    %v739 = vunpack.c.h.b16 %v210
    %v740 = vunpack.c.l.b16 %v211
    %v741 = vunpack.c.h.b16 %v211
    %v742 = vunpack.c.l.b16 %v212
    %v743 = vunpack.c.h.b16 %v212
    %v744 = vunpack.c.l.b16 %v213
    %v745 = vunpack.c.h.b16 %v213
    %v746 = vunpack.c.l.b16 %v214
    %v747 = vunpack.c.h.b16 %v214
    %v748 = vunpack.c.l.b16 %v215
    %v749 = vunpack.c.h.b16 %v215
    %v750 = vunpack.c.l.b16 %v216
    %v751 = vunpack.c.h.b16 %v216
    %v752 = vunpack.c.l.b16 %v217
    %v753 = vunpack.c.h.b16 %v217
    %v754 = vunpack.c.l.b16 %v218
    %v755 = vunpack.c.h.b16 %v218
    %v756 = vunpack.c.l.b16 %v219
    %v757 = vunpack.c.h.b16 %v219
    %v758 = vunpack.c.l.b16 %v220
    %v759 = vunpack.c.h.b16 %v220
    %v760 = vunpack.c.l.b16 %v221
    %v761 = vunpack.c.h.b16 %v221
    %v762 = vunpack.c.l.b16 %v222
    %v763 = vunpack.c.h.b16 %v222
    %v764 = vunpack.c.l.b16 %v223
    %v765 = vunpack.c.h.b16 %v223
    %v766 = vunpack.c.l.b16 %v224
    %v767 = vunpack.c.h.b16 %v224
    %v768 = vunpack.c.l.b16 %v225
    %v769 = vunpack.c.h.b16 %v225
    %v770 = vunpack.c.l.b16 %v226
    %v771 = vunpack.c.h.b16 %v226
    %v772 = vunpack.c.l.b16 %v227
    %v773 = vunpack.c.h.b16 %v227
    %v774 = vunpack.c.l.b16 %v228
    %v775 = vunpack.c.h.b16 %v228
    %v776 = vunpack.c.l.b16 %v229
    %v777 = vunpack.c.h.b16 %v229
    %v778 = vunpack.c.l.b16 %v230
    %v779 = vunpack.c.h.b16 %v230
    %v780 = vunpack.c.l.b16 %v231
    %v781 = vunpack.c.h.b16 %v231
    %v782 = vunpack.c.l.b16 %v232
    %v783 = vunpack.c.h.b16 %v232
    %v784 = vunpack.c.l.b16 %v233
    %v785 = vunpack.c.h.b16 %v233
    %v786 = vunpack.c.l.b16 %v234
    %v787 = vunpack.c.h.b16 %v234
    %v788 = vunpack.c.l.b16 %v235
    %v789 = vunpack.c.h.b16 %v235
    %v790 = vunpack.c.l.b16 %v236
    %v791 = vunpack.c.h.b16 %v236
    %v792 = vunpack.c.l.b16 %v237
    %v793 = vunpack.c.h.b16 %v237
    %v794 = vunpack.c.l.b16 %v238
    %v795 = vunpack.c.h.b16 %v238
    %v796 = vunpack.c.l.b16 %v239
    %v797 = vunpack.c.h.b16 %v239
    %v798 = vunpack.c.l.b16 %v240
    %v799 = vunpack.c.h.b16 %v240
    %v800 = vunpack.c.l.b16 %v241
    %v801 = vunpack.c.h.b16 %v241
    %v802 = vunpack.c.l.b16 %v242
    %v803 = vunpack.c.h.b16 %v242
    %v804 = vunpack.c.l.b16 %v243
    %v805 = vunpack.c.h.b16 %v243
    %v806 = vunpack.c.l.b16 %v244
    %v807 = vunpack.c.h.b16 %v244
    %v808 = vunpack.c.l.b16 %v245
    %v809 = vunpack.c.h.b16 %v245
    %v810 = vunpack.c.l.b16 %v246
    %v811 = vunpack.c.h.b16 %v246
    %v812 = vunpack.c.l.b16 %v247
    %v813 = vunpack.c.h.b16 %v247
    %v814 = vunpack.c.l.b16 %v248
    %v815 = vunpack.c.h.b16 %v248
    %v816 = vunpack.c.l.b16 %v249
    %v817 = vunpack.c.h.b16 %v249
    %v818 = vunpack.c.l.b16 %v250
    %v819 = vunpack.c.h.b16 %v250
    %v820 = vunpack.c.l.b16 %v251
    %v821 = vunpack.c.h.b16 %v251
    %v822 = vunpack.c.l.b16 %v252
    %v823 = vunpack.c.h.b16 %v252
    %v824 = vunpack.c.l.b16 %v253
    %v825 = vunpack.c.h.b16 %v253
    %v826 = vunpack.c.l.b16 %v254
    %v827 = vunpack.c.h.b16 %v254
    %v828 = vunpack.c.l.b16 %v255
    %v829 = vunpack.c.h.b16 %v255
    %v830 = vunpack.c.l.b16 %v256
    %v831 = vunpack.c.h.b16 %v256
    %v832 = vunpack.c.l.b16 %v257
    %v833 = vunpack.c.h.b16 %v257
    %v834 = vunpack.c.l.b16 %v258
    %v835 = vunpack.c.h.b16 %v258
    %v836 = vunpack.c.l.b16 %v259
    %v837 = vunpack.c.h.b16 %v259
    %v838 = vunpack.c.l.b16 %v260
    %v839 = vunpack.c.h.b16 %v260
    %v840 = vunpack.c.l.b16 %v261
    %v841 = vunpack.c.h.b16 %v261
    %v842 = vunpack.c.l.b16 %v262
    %v843 = vunpack.c.h.b16 %v262
    %v844 = vunpack.c.l.b16 %v263
    %v845 = vunpack.c.h.b16 %v263
    %v846 = vunpack.c.l.b16 %v264
    %v847 = vunpack.c.h.b16 %v264
    %v848 = vunpack.c.l.b16 %v265
    %v849 = vunpack.c.h.b16 %v265
    %v850 = vunpack.c.l.b16 %v266
    %v851 = vunpack.c.h.b16 %v266
    %v852 = vunpack.c.l.b16 %v267
    %v853 = vunpack.c.h.b16 %v267
    %v854 = vunpack.c.l.b16 %v268
    %v855 = vunpack.c.h.b16 %v268
    %v856 = vunpack.c.l.b16 %v269
    %v857 = vunpack.c.h.b16 %v269
    %v858 = vunpack.c.l.b16 %v270
    %v859 = vunpack.c.h.b16 %v270
    %v860 = vunpack.c.l.b16 %v271
    %v861 = vunpack.c.h.b16 %v271
    %v862 = vunpack.c.l.b16 %v272
    %v863 = vunpack.c.h.b16 %v272
    %v864 = vunpack.c.l.b16 %v273
    %v865 = vunpack.c.h.b16 %v273
    %v866 = vunpack.c.l.b16 %v274
    %v867 = vunpack.c.h.b16 %v274
    %v868 = vunpack.c.l.b16 %v275
    %v869 = vunpack.c.h.b16 %v275
    %v870 = vunpack.c.l.b16 %v276
    %v871 = vunpack.c.h.b16 %v276
    %v872 = vunpack.c.l.b16 %v277
    %v873 = vunpack.c.h.b16 %v277
    %v874 = vunpack.c.l.b16 %v278
    %v875 = vunpack.c.h.b16 %v278
    %v876 = vunpack.c.l.b16 %v279
    %v877 = vunpack.c.h.b16 %v279
    %v878 = vunpack.c.l.b16 %v280
    %v879 = vunpack.c.h.b16 %v280
    %v880 = vunpack.c.l.b16 %v281
    %v881 = vunpack.c.h.b16 %v281
    %v882 = vunpack.c.l.b16 %v282
    %v883 = vunpack.c.h.b16 %v282
    %v884 = vunpack.c.l.b16 %v283
    %v885 = vunpack.c.h.b16 %v283
    %v886 = vunpack.c.l.b16 %v284
    %v887 = vunpack.c.h.b16 %v284
    %v888 = vunpack.c.l.b16 %v285
    %v889 = vunpack.c.h.b16 %v285
    %v890 = vunpack.c.l.b16 %v286
    %v891 = vunpack.c.h.b16 %v286
    %v892 = vunpack.c.l.b16 %v287
    %v893 = vunpack.c.h.b16 %v287
    %v894 = vunpack.c.l.b16 %v288
    %v895 = vunpack.c.h.b16 %v288
    %v896 = vunpack.c.l.b16 %v289
    %v897 = vunpack.c.h.b16 %v289
    %v898 = vunpack.c.l.b16 %v290
    %v899 = vunpack.c.h.b16 %v290
    %v900 = vunpack.c.l.b16 %v291
    %v901 = vunpack.c.h.b16 %v291
    %v902 = vpack.c.b16 %v514, %v510
    %v903 = vpack.c.b16 %v515, %v511
    %v904 = vpack.c.b16 %v516, %v512
    %v905 = vpack.c.b16 %v517, %v513
    %v906 = vpack.c.b16 %v522, %v518
    %v907 = vpack.c.b16 %v523, %v519
    %v908 = vpack.c.b16 %v524, %v520
    %v909 = vpack.c.b16 %v525, %v521
    %v910 = vpack.c.b16 %v530, %v526
    %v911 = vpack.c.b16 %v531, %v527
    %v912 = vpack.c.b16 %v532, %v528
    %v913 = vpack.c.b16 %v533, %v529
    %v914 = vpack.c.b16 %v538, %v534
    %v915 = vpack.c.b16 %v539, %v535
    %v916 = vpack.c.b16 %v540, %v536
    %v917 = vpack.c.b16 %v541, %v537
    %v918 = vpack.c.b16 %v546, %v542
    %v919 = vpack.c.b16 %v547, %v543
    %v920 = vpack.c.b16 %v548, %v544
    %v921 = vpack.c.b16 %v549, %v545
    %v922 = vpack.c.b16 %v554, %v550
    %v923 = vpack.c.b16 %v555, %v551
    %v924 = vpack.c.b16 %v556, %v552
    %v925 = vpack.c.b16 %v557, %v553
    %v926 = vpack.c.b16 %v562, %v558
    %v927 = vpack.c.b16 %v563, %v559
    %v928 = vpack.c.b16 %v564, %v560
    %v929 = vpack.c.b16 %v565, %v561
    %v930 = vpack.c.b16 %v570, %v566
    %v931 = vpack.c.b16 %v571, %v567
    %v932 = vpack.c.b16 %v572, %v568
    %v933 = vpack.c.b16 %v573, %v569
    %v934 = vpack.c.b16 %v578, %v574
    %v935 = vpack.c.b16 %v579, %v575
    %v936 = vpack.c.b16 %v580, %v576
    %v937 = vpack.c.b16 %v581, %v577
    %v938 = vpack.c.b16 %v586, %v582
    %v939 = vpack.c.b16 %v587, %v583
    %v940 = vpack.c.b16 %v588, %v584
    %v941 = vpack.c.b16 %v589, %v585
    %v942 = vpack.c.b16 %v594, %v590
    %v943 = vpack.c.b16 %v595, %v591
    %v944 = vpack.c.b16 %v596, %v592
    %v945 = vpack.c.b16 %v597, %v593
    %v946 = vpack.c.b16 %v602, %v598
    %v947 = vpack.c.b16 %v603, %v599
    %v948 = vpack.c.b16 %v604, %v600
    %v949 = vpack.c.b16 %v605, %v601
    %v950 = vpack.c.b16 %v610, %v606
    %v951 = vpack.c.b16 %v611, %v607
    %v952 = vpack.c.b16 %v612, %v608
    %v953 = vpack.c.b16 %v613, %v609
    %v954 = vpack.c.b16 %v618, %v614
    %v955 = vpack.c.b16 %v619, %v615
    %v956 = vpack.c.b16 %v620, %v616
    %v957 = vpack.c.b16 %v621, %v617
    %v958 = vpack.c.b16 %v626, %v622
    %v959 = vpack.c.b16 %v627, %v623
    %v960 = vpack.c.b16 %v628, %v624
    %v961 = vpack.c.b16 %v629, %v625
    %v962 = vpack.c.b16 %v634, %v630
    %v963 = vpack.c.b16 %v635, %v631
    %v964 = vpack.c.b16 %v636, %v632
    %v965 = vpack.c.b16 %v637, %v633
    %v966 = vpack.c.b16 %v642, %v638
    %v967 = vpack.c.b16 %v643, %v639
    %v968 = vpack.c.b16 %v644, %v640
    %v969 = vpack.c.b16 %v645, %v641
    %v970 = vpack.c.b16 %v650, %v646
    %v971 = vpack.c.b16 %v651, %v647
    %v972 = vpack.c.b16 %v652, %v648
    %v973 = vpack.c.b16 %v653, %v649
    %v974 = vpack.c.b16 %v658, %v654
    %v975 = vpack.c.b16 %v659, %v655
    %v976 = vpack.c.b16 %v660, %v656
    %v977 = vpack.c.b16 %v661, %v657
    %v978 = vpack.c.b16 %v666, %v662
    %v979 = vpack.c.b16 %v667, %v663
    %v980 = vpack.c.b16 %v668, %v664
    %v981 = vpack.c.b16 %v669, %v665
    %v982 = vpack.c.b16 %v674, %v670
    %v983 = vpack.c.b16 %v675, %v671
    %v984 = vpack.c.b16 %v676, %v672
    %v985 = vpack.c.b16 %v677, %v673
    %v986 = vpack.c.b16 %v682, %v678
    %v987 = vpack.c.b16 %v683, %v679
    %v988 = vpack.c.b16 %v684, %v680
    %v989 = vpack.c.b16 %v685, %v681
    %v990 = vpack.c.b16 %v690, %v686
    %v991 = vpack.c.b16 %v691, %v687
    %v992 = vpack.c.b16 %v692, %v688
    %v993 = vpack.c.b16 %v693, %v689
    %v994 = vpack.c.b16 %v698, %v694
    %v995 = vpack.c.b16 %v699, %v695
    %v996 = vpack.c.b16 %v700, %v696
    %v997 = vpack.c.b16 %v701, %v697
    %v998 = vpack.c.b16 %v706, %v702
    %v999 = vpack.c.b16 %v707, %v703
    %v1000 = vpack.c.b16 %v708, %v704
    %v1001 = vpack.c.b16 %v709, %v705
    %v1002 = vpack.c.b16 %v714, %v710
    %v1003 = vpack.c.b16 %v715, %v711
    %v1004 = vpack.c.b16 %v716, %v712
    %v1005 = vpack.c.b16 %v717, %v713
    %v1006 = vpack.c.b16 %v722, %v718
    %v1007 = vpack.c.b16 %v723, %v719
    %v1008 = vpack.c.b16 %v724, %v720
    %v1009 = vpack.c.b16 %v725, %v721
    %v1010 = vpack.c.b16 %v730, %v726
    %v1011 = vpack.c.b16 %v731, %v727
    %v1012 = vpack.c.b16 %v732, %v728
    %v1013 = vpack.c.b16 %v733, %v729
    %v1014 = vpack.c.b16 %v738, %v734
    %v1015 = vpack.c.b16 %v739, %v735
    %v1016 = vpack.c.b16 %v740, %v736
    %v1017 = vpack.c.b16 %v741, %v737
    %v1018 = vpack.c.b16 %v746, %v742
    %v1019 = vpack.c.b16 %v747, %v743
    %v1020 = vpack.c.b16 %v748, %v744
    %v1021 = vpack.c.b16 %v749, %v745
    %v1022 = vpack.c.b16 %v754, %v750
    %v1023 = vpack.c.b16 %v755, %v751
    %v1024 = vpack.c.b16 %v756, %v752
    %v1025 = vpack.c.b16 %v757, %v753
    %v1026 = vpack.c.b16 %v762, %v758
    %v1027 = vpack.c.b16 %v763, %v759
    %v1028 = vpack.c.b16 %v764, %v760
    %v1029 = vpack.c.b16 %v765, %v761
    %v1030 = vpack.c.b16 %v770, %v766
    %v1031 = vpack.c.b16 %v771, %v767
    %v1032 = vpack.c.b16 %v772, %v768
    %v1033 = vpack.c.b16 %v773, %v769
    %v1034 = vpack.c.b16 %v778, %v774
    %v1035 = vpack.c.b16 %v779, %v775
    %v1036 = vpack.c.b16 %v780, %v776
    %v1037 = vpack.c.b16 %v781, %v777
    %v1038 = vpack.c.b16 %v786, %v782
    %v1039 = vpack.c.b16 %v787, %v783
    %v1040 = vpack.c.b16 %v788, %v784
    %v1041 = vpack.c.b16 %v789, %v785
    %v1042 = vpack.c.b16 %v794, %v790
    %v1043 = vpack.c.b16 %v795, %v791
    %v1044 = vpack.c.b16 %v796, %v792
    %v1045 = vpack.c.b16 %v797, %v793
    %v1046 = vpack.c.b16 %v802, %v798
    %v1047 = vpack.c.b16 %v803, %v799
    %v1048 = vpack.c.b16 %v804, %v800
    %v1049 = vpack.c.b16 %v805, %v801
    %v1050 = vpack.c.b16 %v810, %v806
    %v1051 = vpack.c.b16 %v811, %v807
    %v1052 = vpack.c.b16 %v812, %v808
    %v1053 = vpack.c.b16 %v813, %v809
    %v1054 = vpack.c.b16 %v818, %v814
    %v1055 = vpack.c.b16 %v819, %v815
    %v1056 = vpack.c.b16 %v820, %v816
    %v1057 = vpack.c.b16 %v821, %v817
    %v1058 = vpack.c.b16 %v826, %v822
    %v1059 = vpack.c.b16 %v827, %v823
    %v1060 = vpack.c.b16 %v828, %v824
    %v1061 = vpack.c.b16 %v829, %v825
    %v1062 = vpack.c.b16 %v834, %v830
    %v1063 = vpack.c.b16 %v835, %v831
    %v1064 = vpack.c.b16 %v836, %v832
    %v1065 = vpack.c.b16 %v837, %v833
    %v1066 = vpack.c.b16 %v842, %v838
    %v1067 = vpack.c.b16 %v843, %v839
    %v1068 = vpack.c.b16 %v844, %v840
    %v1069 = vpack.c.b16 %v845, %v841
    %v1070 = vpack.c.b16 %v850, %v846
    %v1071 = vpack.c.b16 %v851, %v847
    %v1072 = vpack.c.b16 %v852, %v848
    %v1073 = vpack.c.b16 %v853, %v849
    %v1074 = vpack.c.b16 %v858, %v854
    %v1075 = vpack.c.b16 %v859, %v855
    %v1076 = vpack.c.b16 %v860, %v856
    %v1077 = vpack.c.b16 %v861, %v857
    %v1078 = vpack.c.b16 %v866, %v862
    %v1079 = vpack.c.b16 %v867, %v863
    %v1080 = vpack.c.b16 %v868, %v864
    %v1081 = vpack.c.b16 %v869, %v865
    %v1082 = vpack.c.b16 %v874, %v870
    %v1083 = vpack.c.b16 %v875, %v871
    %v1084 = vpack.c.b16 %v876, %v872
    %v1085 = vpack.c.b16 %v877, %v873
    %v1086 = vpack.c.b16 %v882, %v878
    %v1087 = vpack.c.b16 %v883, %v879
    %v1088 = vpack.c.b16 %v884, %v880
    %v1089 = vpack.c.b16 %v885, %v881
    %v1090 = vpack.c.b16 %v890, %v886
    %v1091 = vpack.c.b16 %v891, %v887
    %v1092 = vpack.c.b16 %v892, %v888
    %v1093 = vpack.c.b16 %v893, %v889
    %v1094 = vpack.c.b16 %v898, %v894
    %v1095 = vpack.c.b16 %v899, %v895
    %v1096 = vpack.c.b16 %v900, %v896
    %v1097 = vpack.c.b16 %v901, %v897
    %vm1294 = vcmask 130048
    %v1296 = vsel %vm1294, %v95, 0
    %1298 = vmatprep.subr.bf16.mxu0 %v931
    %1299 = vmatpush1.bf16.msra.mxu0 %v930
    %1300 = vmatprep.subr.bf16.mxu0 %v927
    %1301 = vmatpush1.bf16.msra.mxu0 %v926
    %1302 = vmatprep.subr.bf16.mxu0 %v923
    %1303 = vmatpush1.bf16.msra.mxu0 %v922
    %1304 = vmatprep.subr.bf16.mxu0 %v919
    %1305 = vmatpush1.bf16.msra.mxu0 %v918
    %1306 = vmatprep.subr.bf16.mxu0 %v915
    %1307 = vmatpush1.bf16.msra.mxu0 %v914
    %1308 = vmatprep.subr.bf16.mxu0 %v911
    %1309 = vmatpush1.bf16.msra.mxu0 %v910
    %1310 = vmatprep.subr.bf16.mxu0 %v907
    %1311 = vmatpush1.bf16.msra.mxu0 %v906
    %1312 = vmatprep.subr.bf16.mxu0 %v903
    %1313 = vmatpush1.bf16.msra.mxu0 %v902
    %1314 = vmatprep.subr.bf16.mxu0 %v963
    %1315 = vmatpush2.bf16.msra.mxu0 %v962
    %1316 = vmatprep.subr.bf16.mxu0 %v959
    %1317 = vmatpush2.bf16.msra.mxu0 %v958
    %1318 = vmatprep.subr.bf16.mxu0 %v955
    %1319 = vmatpush2.bf16.msra.mxu0 %v954
    %1320 = vmatprep.subr.bf16.mxu0 %v951
    %1321 = vmatpush2.bf16.msra.mxu0 %v950
    %1322 = vmatprep.subr.bf16.mxu0 %v947
    %1323 = vmatpush2.bf16.msra.mxu0 %v946
    %1324 = vmatprep.subr.bf16.mxu0 %v943
    %1325 = vmatpush2.bf16.msra.mxu0 %v942
    %1326 = vmatprep.subr.bf16.mxu0 %v939
    %1327 = vmatpush2.bf16.msra.mxu0 %v938
    %1328 = vmatprep.subr.bf16.mxu0 %v935
    %1329 = vmatpush2.bf16.msra.mxu0 %v934
    %1330 = vmatprep.mubr.bf16.mxu0 %v90
    %1331 = vmatmul.mubr.bf16.gmra.mxu0 %v89
    %v1332 = vpop.f32.mrf.mxu0
    %v1333 = vadd.f32 %v297, %v1332
    %v1334 = vpop.f32.mrf.mxu0
    %v1335 = vadd.f32 %v301, %v1334
    %v1336 = vpop.f32.mrf.mxu0
    %v1337 = vadd.f32 %v297, %v1336
    %v1338 = vpop.f32.mrf.mxu0
    %v1339 = vadd.f32 %v301, %v1338
    %1340 = vdwg.mxu0
    %1341 = vmatprep.subr.bf16.mxu0 %v995
    %1342 = vmatpush1.bf16.msra.mxu0 %v994
    %1343 = vmatprep.subr.bf16.mxu0 %v991
    %1344 = vmatpush1.bf16.msra.mxu0 %v990
    %1345 = vmatprep.subr.bf16.mxu0 %v987
    %1346 = vmatpush1.bf16.msra.mxu0 %v986
    %1347 = vmatprep.subr.bf16.mxu0 %v983
    %1348 = vmatpush1.bf16.msra.mxu0 %v982
    %1349 = vmatprep.subr.bf16.mxu0 %v979
    %1350 = vmatpush1.bf16.msra.mxu0 %v978
    %1351 = vmatprep.subr.bf16.mxu0 %v975
    %1352 = vmatpush1.bf16.msra.mxu0 %v974
    %1353 = vmatprep.subr.bf16.mxu0 %v971
    %1354 = vmatpush1.bf16.msra.mxu0 %v970
    %1355 = vmatprep.subr.bf16.mxu0 %v967
    %1356 = vmatpush1.bf16.msra.mxu0 %v966
    %1357 = vmatprep.subr.bf16.mxu0 %v1027
    %1358 = vmatpush2.bf16.msra.mxu0 %v1026
    %1359 = vmatprep.subr.bf16.mxu0 %v1023
    %1360 = vmatpush2.bf16.msra.mxu0 %v1022
    %1361 = vmatprep.subr.bf16.mxu0 %v1019
    %1362 = vmatpush2.bf16.msra.mxu0 %v1018
    %1363 = vmatprep.subr.bf16.mxu0 %v1015
    %1364 = vmatpush2.bf16.msra.mxu0 %v1014
    %1365 = vmatprep.subr.bf16.mxu0 %v1011
    %1366 = vmatpush2.bf16.msra.mxu0 %v1010
    %1367 = vmatprep.subr.bf16.mxu0 %v1007
    %1368 = vmatpush2.bf16.msra.mxu0 %v1006
    %1369 = vmatprep.subr.bf16.mxu0 %v1003
    %1370 = vmatpush2.bf16.msra.mxu0 %v1002
    %1371 = vmatprep.subr.bf16.mxu0 %v999
    %1372 = vmatpush2.bf16.msra.mxu0 %v998
    %1373 = vmatprep.mubr.bf16.mxu0 %v92
    %1374 = vmatmul.mubr.bf16.gmra.mxu0 %v91
    %v1375 = vpop.f32.mrf.mxu0
    %v1376 = vadd.f32 %v1333, %v1375
    %v1377 = vpop.f32.mrf.mxu0
    %v1378 = vadd.f32 %v1335, %v1377
    %v1379 = vpop.f32.mrf.mxu0
    %v1380 = vadd.f32 %v1337, %v1379
    %v1381 = vpop.f32.mrf.mxu0
    %v1382 = vadd.f32 %v1339, %v1381
    %1383 = vdwg.mxu0
    %1384 = vmatprep.subr.bf16.mxu0 %v1059
    %1385 = vmatpush1.bf16.msra.mxu0 %v1058
    %1386 = vmatprep.subr.bf16.mxu0 %v1055
    %1387 = vmatpush1.bf16.msra.mxu0 %v1054
    %1388 = vmatprep.subr.bf16.mxu0 %v1051
    %1389 = vmatpush1.bf16.msra.mxu0 %v1050
    %1390 = vmatprep.subr.bf16.mxu0 %v1047
    %1391 = vmatpush1.bf16.msra.mxu0 %v1046
    %1392 = vmatprep.subr.bf16.mxu0 %v1043
    %1393 = vmatpush1.bf16.msra.mxu0 %v1042
    %1394 = vmatprep.subr.bf16.mxu0 %v1039
    %1395 = vmatpush1.bf16.msra.mxu0 %v1038
    %1396 = vmatprep.subr.bf16.mxu0 %v1035
    %1397 = vmatpush1.bf16.msra.mxu0 %v1034
    %1398 = vmatprep.subr.bf16.mxu0 %v1031
    %1399 = vmatpush1.bf16.msra.mxu0 %v1030
    %1400 = vmatprep.subr.bf16.mxu0 %v1091
    %1401 = vmatpush2.bf16.msra.mxu0 %v1090
    %1402 = vmatprep.subr.bf16.mxu0 %v1087
    %1403 = vmatpush2.bf16.msra.mxu0 %v1086
    %1404 = vmatprep.subr.bf16.mxu0 %v1083
    %1405 = vmatpush2.bf16.msra.mxu0 %v1082
    %1406 = vmatprep.subr.bf16.mxu0 %v1079
    %1407 = vmatpush2.bf16.msra.mxu0 %v1078
    %1408 = vmatprep.subr.bf16.mxu0 %v1075
    %1409 = vmatpush2.bf16.msra.mxu0 %v1074
    %1410 = vmatprep.subr.bf16.mxu0 %v1071
    %1411 = vmatpush2.bf16.msra.mxu0 %v1070
    %1412 = vmatprep.subr.bf16.mxu0 %v1067
    %1413 = vmatpush2.bf16.msra.mxu0 %v1066
    %1414 = vmatprep.subr.bf16.mxu0 %v1063
    %1415 = vmatpush2.bf16.msra.mxu0 %v1062
    %1416 = vmatprep.mubr.bf16.mxu0 %v94
    %1417 = vmatmul.mubr.bf16.gmra.mxu0 %v93
    %v1418 = vpop.f32.mrf.mxu0
    %v1419 = vadd.f32 %v1376, %v1418
    %v1420 = vpop.f32.mrf.mxu0
    %v1421 = vadd.f32 %v1378, %v1420
    %v1422 = vpop.f32.mrf.mxu0
    %v1423 = vadd.f32 %v1380, %v1422
    %v1424 = vpop.f32.mrf.mxu0
    %v1425 = vadd.f32 %v1382, %v1424
    %1426 = vdwg.mxu0
    %1427 = vmatprep.subr.bf16.mxu0 0
    %1428 = vmatpush1.bf16.msra.mxu0 0
    %1429 = vmatprep.subr.bf16.mxu0 0
    %1430 = vmatpush1.bf16.msra.mxu0 0
    %1431 = vmatprep.subr.bf16.mxu0 0
    %1432 = vmatpush1.bf16.msra.mxu0 0
    %1433 = vmatprep.subr.bf16.mxu0 0
    %1434 = vmatpush1.bf16.msra.mxu0 0
    %1435 = vmatprep.subr.bf16.mxu0 0
    %1436 = vmatpush1.bf16.msra.mxu0 0
    %1437 = vmatprep.subr.bf16.mxu0 0
    %1438 = vmatpush1.bf16.msra.mxu0 0
    %1439 = vmatprep.subr.bf16.mxu0 0
    %1440 = vmatpush1.bf16.msra.mxu0 0
    %1441 = vmatprep.subr.bf16.mxu0 %v1095
    %1442 = vmatpush1.bf16.msra.mxu0 %v1094
    %1443 = vmatprep.subr.bf16.mxu0 0
    %1444 = vmatpush2.bf16.msra.mxu0 0
    %1445 = vmatprep.subr.bf16.mxu0 0
    %1446 = vmatpush2.bf16.msra.mxu0 0
    %1447 = vmatprep.subr.bf16.mxu0 0
    %1448 = vmatpush2.bf16.msra.mxu0 0
    %1449 = vmatprep.subr.bf16.mxu0 0
    %1450 = vmatpush2.bf16.msra.mxu0 0
    %1451 = vmatprep.subr.bf16.mxu0 0
    %1452 = vmatpush2.bf16.msra.mxu0 0
    %1453 = vmatprep.subr.bf16.mxu0 0
    %1454 = vmatpush2.bf16.msra.mxu0 0
    %1455 = vmatprep.subr.bf16.mxu0 0
    %1456 = vmatpush2.bf16.msra.mxu0 0
    %1457 = vmatprep.subr.bf16.mxu0 0
    %1458 = vmatpush2.bf16.msra.mxu0 0
    %1459 = vmatprep.mubr.bf16.mxu0 0
    %1460 = vmatmul.mubr.bf16.gmra.mxu0 %v1296
    %v1461 = vpop.f32.mrf.mxu0
    %v1462 = vadd.f32 %v1419, %v1461
    %v1463 = vpop.f32.mrf.mxu0
    %v1464 = vadd.f32 %v1421, %v1463
    %v1465 = vpop.f32.mrf.mxu0
    %v1466 = vadd.f32 %v1423, %v1465
    %v1467 = vpop.f32.mrf.mxu0
    %v1468 = vadd.f32 %v1425, %v1467
    %1469 = vdwg.mxu0
    %1470 = vmatprep.subr.bf16.mxu0 %v933
    %1471 = vmatpush1.bf16.msra.mxu0 %v932
    %1472 = vmatprep.subr.bf16.mxu0 %v929
    %1473 = vmatpush1.bf16.msra.mxu0 %v928
    %1474 = vmatprep.subr.bf16.mxu0 %v925
    %1475 = vmatpush1.bf16.msra.mxu0 %v924
    %1476 = vmatprep.subr.bf16.mxu0 %v921
    %1477 = vmatpush1.bf16.msra.mxu0 %v920
    %1478 = vmatprep.subr.bf16.mxu0 %v917
    %1479 = vmatpush1.bf16.msra.mxu0 %v916
    %1480 = vmatprep.subr.bf16.mxu0 %v913
    %1481 = vmatpush1.bf16.msra.mxu0 %v912
    %1482 = vmatprep.subr.bf16.mxu0 %v909
    %1483 = vmatpush1.bf16.msra.mxu0 %v908
    %1484 = vmatprep.subr.bf16.mxu0 %v905
    %1485 = vmatpush1.bf16.msra.mxu0 %v904
    %1486 = vmatprep.subr.bf16.mxu0 %v965
    %1487 = vmatpush2.bf16.msra.mxu0 %v964
    %1488 = vmatprep.subr.bf16.mxu0 %v961
    %1489 = vmatpush2.bf16.msra.mxu0 %v960
    %1490 = vmatprep.subr.bf16.mxu0 %v957
    %1491 = vmatpush2.bf16.msra.mxu0 %v956
    %1492 = vmatprep.subr.bf16.mxu0 %v953
    %1493 = vmatpush2.bf16.msra.mxu0 %v952
    %1494 = vmatprep.subr.bf16.mxu0 %v949
    %1495 = vmatpush2.bf16.msra.mxu0 %v948
    %1496 = vmatprep.subr.bf16.mxu0 %v945
    %1497 = vmatpush2.bf16.msra.mxu0 %v944
    %1498 = vmatprep.subr.bf16.mxu0 %v941
    %1499 = vmatpush2.bf16.msra.mxu0 %v940
    %1500 = vmatprep.subr.bf16.mxu0 %v937
    %1501 = vmatpush2.bf16.msra.mxu0 %v936
    %1502 = vmatprep.mubr.bf16.mxu0 %v90
    %1503 = vmatmul.mubr.bf16.gmra.mxu0 %v89
    %v1504 = vpop.f32.mrf.mxu0
    %v1505 = vadd.f32 %v305, %v1504
    %v1506 = vpop.f32.mrf.mxu0
    %v1507 = vadd.f32 %v309, %v1506
    %v1508 = vpop.f32.mrf.mxu0
    %v1509 = vadd.f32 %v305, %v1508
    %v1510 = vpop.f32.mrf.mxu0
    %v1511 = vadd.f32 %v309, %v1510
    %1512 = vdwg.mxu0
    %1513 = vmatprep.subr.bf16.mxu0 %v997
    %1514 = vmatpush1.bf16.msra.mxu0 %v996
    %1515 = vmatprep.subr.bf16.mxu0 %v993
    %1516 = vmatpush1.bf16.msra.mxu0 %v992
    %1517 = vmatprep.subr.bf16.mxu0 %v989
    %1518 = vmatpush1.bf16.msra.mxu0 %v988
    %1519 = vmatprep.subr.bf16.mxu0 %v985
    %1520 = vmatpush1.bf16.msra.mxu0 %v984
    %1521 = vmatprep.subr.bf16.mxu0 %v981
    %1522 = vmatpush1.bf16.msra.mxu0 %v980
    %1523 = vmatprep.subr.bf16.mxu0 %v977
    %1524 = vmatpush1.bf16.msra.mxu0 %v976
    %1525 = vmatprep.subr.bf16.mxu0 %v973
    %1526 = vmatpush1.bf16.msra.mxu0 %v972
    %1527 = vmatprep.subr.bf16.mxu0 %v969
    %1528 = vmatpush1.bf16.msra.mxu0 %v968
    %1529 = vmatprep.subr.bf16.mxu0 %v1029
    %1530 = vmatpush2.bf16.msra.mxu0 %v1028
    %1531 = vmatprep.subr.bf16.mxu0 %v1025
    %1532 = vmatpush2.bf16.msra.mxu0 %v1024
    %1533 = vmatprep.subr.bf16.mxu0 %v1021
    %1534 = vmatpush2.bf16.msra.mxu0 %v1020
    %1535 = vmatprep.subr.bf16.mxu0 %v1017
    %1536 = vmatpush2.bf16.msra.mxu0 %v1016
    %1537 = vmatprep.subr.bf16.mxu0 %v1013
    %1538 = vmatpush2.bf16.msra.mxu0 %v1012
    %1539 = vmatprep.subr.bf16.mxu0 %v1009
    %1540 = vmatpush2.bf16.msra.mxu0 %v1008
    %1541 = vmatprep.subr.bf16.mxu0 %v1005
    %1542 = vmatpush2.bf16.msra.mxu0 %v1004
    %1543 = vmatprep.subr.bf16.mxu0 %v1001
    %1544 = vmatpush2.bf16.msra.mxu0 %v1000
    %1545 = vmatprep.mubr.bf16.mxu0 %v92
    %1546 = vmatmul.mubr.bf16.gmra.mxu0 %v91
    %v1547 = vpop.f32.mrf.mxu0
    %v1548 = vadd.f32 %v1505, %v1547
    %v1549 = vpop.f32.mrf.mxu0
    %v1550 = vadd.f32 %v1507, %v1549
    %v1551 = vpop.f32.mrf.mxu0
    %v1552 = vadd.f32 %v1509, %v1551
    %v1553 = vpop.f32.mrf.mxu0
    %v1554 = vadd.f32 %v1511, %v1553
    %1555 = vdwg.mxu0
    %1556 = vmatprep.subr.bf16.mxu0 %v1061
    %1557 = vmatpush1.bf16.msra.mxu0 %v1060
    %1558 = vmatprep.subr.bf16.mxu0 %v1057
    %1559 = vmatpush1.bf16.msra.mxu0 %v1056
    %1560 = vmatprep.subr.bf16.mxu0 %v1053
    %1561 = vmatpush1.bf16.msra.mxu0 %v1052
    %1562 = vmatprep.subr.bf16.mxu0 %v1049
    %1563 = vmatpush1.bf16.msra.mxu0 %v1048
    %1564 = vmatprep.subr.bf16.mxu0 %v1045
    %1565 = vmatpush1.bf16.msra.mxu0 %v1044
    %1566 = vmatprep.subr.bf16.mxu0 %v1041
    %1567 = vmatpush1.bf16.msra.mxu0 %v1040
    %1568 = vmatprep.subr.bf16.mxu0 %v1037
    %1569 = vmatpush1.bf16.msra.mxu0 %v1036
    %1570 = vmatprep.subr.bf16.mxu0 %v1033
    %1571 = vmatpush1.bf16.msra.mxu0 %v1032
    %1572 = vmatprep.subr.bf16.mxu0 %v1093
    %1573 = vmatpush2.bf16.msra.mxu0 %v1092
    %1574 = vmatprep.subr.bf16.mxu0 %v1089
    %1575 = vmatpush2.bf16.msra.mxu0 %v1088
    %1576 = vmatprep.subr.bf16.mxu0 %v1085
    %1577 = vmatpush2.bf16.msra.mxu0 %v1084
    %1578 = vmatprep.subr.bf16.mxu0 %v1081
    %1579 = vmatpush2.bf16.msra.mxu0 %v1080
    %1580 = vmatprep.subr.bf16.mxu0 %v1077
    %1581 = vmatpush2.bf16.msra.mxu0 %v1076
    %1582 = vmatprep.subr.bf16.mxu0 %v1073
    %1583 = vmatpush2.bf16.msra.mxu0 %v1072
    %1584 = vmatprep.subr.bf16.mxu0 %v1069
    %1585 = vmatpush2.bf16.msra.mxu0 %v1068
    %1586 = vmatprep.subr.bf16.mxu0 %v1065
    %1587 = vmatpush2.bf16.msra.mxu0 %v1064
    %1588 = vmatprep.mubr.bf16.mxu0 %v94
    %1589 = vmatmul.mubr.bf16.gmra.mxu0 %v93
    %v1590 = vpop.f32.mrf.mxu0
    %v1591 = vadd.f32 %v1548, %v1590
    %v1592 = vpop.f32.mrf.mxu0
    %v1593 = vadd.f32 %v1550, %v1592
    %v1594 = vpop.f32.mrf.mxu0
    %v1595 = vadd.f32 %v1552, %v1594
    %v1596 = vpop.f32.mrf.mxu0
    %v1597 = vadd.f32 %v1554, %v1596
    %1598 = vdwg.mxu0
    %1599 = vmatprep.subr.bf16.mxu0 0
    %1600 = vmatpush1.bf16.msra.mxu0 0
    %1601 = vmatprep.subr.bf16.mxu0 0
    %1602 = vmatpush1.bf16.msra.mxu0 0
    %1603 = vmatprep.subr.bf16.mxu0 0
    %1604 = vmatpush1.bf16.msra.mxu0 0
    %1605 = vmatprep.subr.bf16.mxu0 0
    %1606 = vmatpush1.bf16.msra.mxu0 0
    %1607 = vmatprep.subr.bf16.mxu0 0
    %1608 = vmatpush1.bf16.msra.mxu0 0
    %1609 = vmatprep.subr.bf16.mxu0 0
    %1610 = vmatpush1.bf16.msra.mxu0 0
    %1611 = vmatprep.subr.bf16.mxu0 0
    %1612 = vmatpush1.bf16.msra.mxu0 0
    %1613 = vmatprep.subr.bf16.mxu0 %v1097
    %1614 = vmatpush1.bf16.msra.mxu0 %v1096
    %1615 = vmatprep.subr.bf16.mxu0 0
    %1616 = vmatpush2.bf16.msra.mxu0 0
    %1617 = vmatprep.subr.bf16.mxu0 0
    %1618 = vmatpush2.bf16.msra.mxu0 0
    %1619 = vmatprep.subr.bf16.mxu0 0
    %1620 = vmatpush2.bf16.msra.mxu0 0
    %1621 = vmatprep.subr.bf16.mxu0 0
    %1622 = vmatpush2.bf16.msra.mxu0 0
    %1623 = vmatprep.subr.bf16.mxu0 0
    %1624 = vmatpush2.bf16.msra.mxu0 0
    %1625 = vmatprep.subr.bf16.mxu0 0
    %1626 = vmatpush2.bf16.msra.mxu0 0
    %1627 = vmatprep.subr.bf16.mxu0 0
    %1628 = vmatpush2.bf16.msra.mxu0 0
    %1629 = vmatprep.subr.bf16.mxu0 0
    %1630 = vmatpush2.bf16.msra.mxu0 0
    %1631 = vmatprep.mubr.bf16.mxu0 0
    %1632 = vmatmul.mubr.bf16.gmra.mxu0 %v1296
    %v1633 = vpop.f32.mrf.mxu0
    %v1634 = vadd.f32 %v1591, %v1633
    %v1635 = vpop.f32.mrf.mxu0
    %v1636 = vadd.f32 %v1593, %v1635
    %v1637 = vpop.f32.mrf.mxu0
    %v1638 = vadd.f32 %v1595, %v1637
    %v1639 = vpop.f32.mrf.mxu0
    %v1640 = vadd.f32 %v1597, %v1639
    %1641 = vdwg.mxu0
    %v1642 = vmax.f32 %v1462, 0.0
    %v1643 = vmax.f32 %v1464, 0.0
    %v1644 = vmax.f32 %v1634, 0.0
    %v1645 = vmax.f32 %v1636, 0.0
    %v1646 = vmax.f32 %v1466, 0.0
    %v1647 = vmax.f32 %v1468, 0.0
    %v1648 = vmax.f32 %v1638, 0.0
    %v1649 = vmax.f32 %v1640, 0.0
    %v1650 = vpack.c.bf16 %v1646, %v1642
    %v1651 = vpack.c.bf16 %v1647, %v1643
    %v1652 = vpack.c.bf16 %v1648, %v1644
    %v1653 = vpack.c.bf16 %v1649, %v1645
    %v1654 = vld [vmem:[#allocation8] sm:$0xf]
    %v1655 = vld [vmem:[#allocation8 + $0x4] sm:$0xf]
    %v1656 = vld [vmem:[#allocation8 + $0x8] sm:$0xf]
    %v1657 = vld [vmem:[#allocation8 + $0xc] sm:$0xf]
    %v1658 = vld [vmem:[#allocation8 + $0x10] sm:$0xf]
    %v1659 = vld [vmem:[#allocation8 + $0x14] sm:$0xf]
    %v1660 = vld [vmem:[#allocation8 + $0x18] sm:$0xf]
    %v1661 = vld [vmem:[#allocation8 + $0x1c] sm:$0xf]
    %v1662 = vld [vmem:[#allocation8 + $0x20] sm:$0xf]
    %v1663 = vld [vmem:[#allocation8 + $0x24] sm:$0xf]
    %v1664 = vld [vmem:[#allocation8 + $0x28] sm:$0xf]
    %v1665 = vld [vmem:[#allocation8 + $0x2c] sm:$0xf]
    %v1666 = vld [vmem:[#allocation8 + $0x30] sm:$0xf]
    %v1667 = vld [vmem:[#allocation8 + $0x34] sm:$0xf]
    %v1668 = vld [vmem:[#allocation8 + $0x38] sm:$0xf]
    %v1669 = vld [vmem:[#allocation8 + $0x3c] sm:$0xf]
    %v1670 = vld [vmem:[#allocation8 + $0x40] sm:$0xf]
    %v1671 = vld [vmem:[#allocation8 + $0x44] sm:$0xf]
    %v1672 = vld [vmem:[#allocation8 + $0x48] sm:$0xf]
    %v1673 = vld [vmem:[#allocation8 + $0x4c] sm:$0xf]
    %v1674 = vld [vmem:[#allocation8 + $0x50] sm:$0xf]
    %v1675 = vld [vmem:[#allocation8 + $0x54] sm:$0xf]
    %v1676 = vld [vmem:[#allocation8 + $0x58] sm:$0xf]
    %v1677 = vld [vmem:[#allocation8 + $0x5c] sm:$0xf]
    %v1678 = vld [vmem:[#allocation8 + $0x60] sm:$0xf]
    %v1679 = vld [vmem:[#allocation8 + $0x64] sm:$0xf]
    %v1680 = vld [vmem:[#allocation8 + $0x68] sm:$0xf]
    %v1681 = vld [vmem:[#allocation8 + $0x6c] sm:$0xf]
    %v1682 = vld [vmem:[#allocation8 + $0x70] sm:$0xf]
    %v1683 = vld [vmem:[#allocation8 + $0x74] sm:$0xf]
    %v1684 = vld [vmem:[#allocation8 + $0x78] sm:$0xf]
    %v1685 = vld [vmem:[#allocation8 + $0x7c] sm:$0xf]
    %v1686 = vld [vmem:[#allocation8 + $0x80] sm:$0xf]
    %v1687 = vld [vmem:[#allocation8 + $0x84] sm:$0xf]
    %v1688 = vld [vmem:[#allocation8 + $0x88] sm:$0xf]
    %v1689 = vld [vmem:[#allocation8 + $0x8c] sm:$0xf]
    %v1690 = vld [vmem:[#allocation8 + $0x90] sm:$0xf]
    %v1691 = vld [vmem:[#allocation8 + $0x94] sm:$0xf]
    %v1692 = vld [vmem:[#allocation8 + $0x98] sm:$0xf]
    %v1693 = vld [vmem:[#allocation8 + $0x9c] sm:$0xf]
    %v1694 = vld [vmem:[#allocation8 + $0xa0] sm:$0xf]
    %v1695 = vld [vmem:[#allocation8 + $0xa4] sm:$0xf]
    %v1696 = vld [vmem:[#allocation8 + $0xa8] sm:$0xf]
    %v1697 = vld [vmem:[#allocation8 + $0xac] sm:$0xf]
    %v1698 = vld [vmem:[#allocation8 + $0xb0] sm:$0xf]
    %v1699 = vld [vmem:[#allocation8 + $0xb4] sm:$0xf]
    %v1700 = vld [vmem:[#allocation8 + $0xb8] sm:$0xf]
    %v1701 = vld [vmem:[#allocation8 + $0xbc] sm:$0xf]
    %v1702 = vld [vmem:[#allocation8 + $0xc0] sm:$0xf]
    %v1703 = vld [vmem:[#allocation8 + $0xc4] sm:$0xf]
    %v1704 = vld [vmem:[#allocation8 + $0xc8] sm:$0xf]
    %v1705 = vld [vmem:[#allocation8 + $0xcc] sm:$0xf]
    %v1706 = vld [vmem:[#allocation8 + $0xd0] sm:$0xf]
    %v1707 = vld [vmem:[#allocation8 + $0xd4] sm:$0xf]
    %v1708 = vld [vmem:[#allocation8 + $0xd8] sm:$0xf]
    %v1709 = vld [vmem:[#allocation8 + $0xdc] sm:$0xf]
    %v1710 = vld [vmem:[#allocation8 + $0xe0] sm:$0xf]
    %v1711 = vld [vmem:[#allocation8 + $0xe4] sm:$0xf]
    %v1712 = vld [vmem:[#allocation8 + $0xe8] sm:$0xf]
    %v1713 = vld [vmem:[#allocation8 + $0xec] sm:$0xf]
    %v1714 = vld [vmem:[#allocation8 + $0xf0] sm:$0xf]
    %v1715 = vld [vmem:[#allocation8 + $0xf4] sm:$0xf]
    %v1716 = vld [vmem:[#allocation8 + $0xf8] sm:$0xf]
    %v1717 = vld [vmem:[#allocation8 + $0xfc] sm:$0xf]
    %v1718 = vld [vmem:[%s4] sm:$0x1]
    %v1720 = vlaneseq
    %v1721 = vshrl.u32 %v1720, 7
    %v1722 = vsub.s32 0, %v1721
    %v1723 = vrot.slane %v1718, %v1722
    %v1789 = vunpack.c.l.b16 %v1654
    %v1790 = vunpack.c.l.b16 %v1655
    %v1791 = vunpack.c.l.b16 %v1656
    %v1792 = vunpack.c.l.b16 %v1657
    %v1793 = vunpack.c.l.b16 %v1658
    %v1794 = vunpack.c.l.b16 %v1659
    %v1795 = vunpack.c.l.b16 %v1660
    %v1796 = vunpack.c.l.b16 %v1661
    %v1797 = vunpack.c.l.b16 %v1662
    %v1798 = vunpack.c.l.b16 %v1663
    %v1799 = vunpack.c.l.b16 %v1664
    %v1800 = vunpack.c.l.b16 %v1665
    %v1801 = vunpack.c.l.b16 %v1666
    %v1802 = vunpack.c.l.b16 %v1667
    %v1803 = vunpack.c.l.b16 %v1668
    %v1804 = vunpack.c.l.b16 %v1669
    %v1805 = vunpack.c.l.b16 %v1670
    %v1806 = vunpack.c.l.b16 %v1671
    %v1807 = vunpack.c.l.b16 %v1672
    %v1808 = vunpack.c.l.b16 %v1673
    %v1809 = vunpack.c.l.b16 %v1674
    %v1810 = vunpack.c.l.b16 %v1675
    %v1811 = vunpack.c.l.b16 %v1676
    %v1812 = vunpack.c.l.b16 %v1677
    %v1813 = vunpack.c.l.b16 %v1678
    %v1814 = vunpack.c.l.b16 %v1679
    %v1815 = vunpack.c.l.b16 %v1680
    %v1816 = vunpack.c.l.b16 %v1681
    %v1817 = vunpack.c.l.b16 %v1682
    %v1818 = vunpack.c.l.b16 %v1683
    %v1819 = vunpack.c.l.b16 %v1684
    %v1820 = vunpack.c.l.b16 %v1685
    %v1821 = vunpack.c.l.b16 %v1686
    %v1822 = vunpack.c.l.b16 %v1687
    %v1823 = vunpack.c.l.b16 %v1688
    %v1824 = vunpack.c.l.b16 %v1689
    %v1825 = vunpack.c.l.b16 %v1690
    %v1826 = vunpack.c.l.b16 %v1691
    %v1827 = vunpack.c.l.b16 %v1692
    %v1828 = vunpack.c.l.b16 %v1693
    %v1829 = vunpack.c.l.b16 %v1694
    %v1830 = vunpack.c.l.b16 %v1695
    %v1831 = vunpack.c.l.b16 %v1696
    %v1832 = vunpack.c.l.b16 %v1697
    %v1833 = vunpack.c.l.b16 %v1698
    %v1834 = vunpack.c.l.b16 %v1699
    %v1835 = vunpack.c.l.b16 %v1700
    %v1836 = vunpack.c.l.b16 %v1701
    %v1837 = vunpack.c.l.b16 %v1702
    %v1838 = vunpack.c.l.b16 %v1703
    %v1839 = vunpack.c.l.b16 %v1704
    %v1840 = vunpack.c.l.b16 %v1705
    %v1841 = vunpack.c.l.b16 %v1706
    %v1842 = vunpack.c.l.b16 %v1707
    %v1843 = vunpack.c.l.b16 %v1708
    %v1844 = vunpack.c.l.b16 %v1709
    %v1845 = vunpack.c.l.b16 %v1710
    %v1846 = vunpack.c.l.b16 %v1711
    %v1847 = vunpack.c.l.b16 %v1712
    %v1848 = vunpack.c.l.b16 %v1713
    %v1849 = vunpack.c.l.b16 %v1714
    %v1850 = vunpack.c.l.b16 %v1715
    %v1851 = vunpack.c.l.b16 %v1716
    %v1852 = vunpack.c.l.b16 %v1717
    %v1853 = vpack.c.b16 %v1790, %v1789
    %v1854 = vpack.c.b16 %v1792, %v1791
    %v1855 = vpack.c.b16 %v1794, %v1793
    %v1856 = vpack.c.b16 %v1796, %v1795
    %v1857 = vpack.c.b16 %v1798, %v1797
    %v1858 = vpack.c.b16 %v1800, %v1799
    %v1859 = vpack.c.b16 %v1802, %v1801
    %v1860 = vpack.c.b16 %v1804, %v1803
    %v1861 = vpack.c.b16 %v1806, %v1805
    %v1862 = vpack.c.b16 %v1808, %v1807
    %v1863 = vpack.c.b16 %v1810, %v1809
    %v1864 = vpack.c.b16 %v1812, %v1811
    %v1865 = vpack.c.b16 %v1814, %v1813
    %v1866 = vpack.c.b16 %v1816, %v1815
    %v1867 = vpack.c.b16 %v1818, %v1817
    %v1868 = vpack.c.b16 %v1820, %v1819
    %v1869 = vpack.c.b16 %v1822, %v1821
    %v1870 = vpack.c.b16 %v1824, %v1823
    %v1871 = vpack.c.b16 %v1826, %v1825
    %v1872 = vpack.c.b16 %v1828, %v1827
    %v1873 = vpack.c.b16 %v1830, %v1829
    %v1874 = vpack.c.b16 %v1832, %v1831
    %v1875 = vpack.c.b16 %v1834, %v1833
    %v1876 = vpack.c.b16 %v1836, %v1835
    %v1877 = vpack.c.b16 %v1838, %v1837
    %v1878 = vpack.c.b16 %v1840, %v1839
    %v1879 = vpack.c.b16 %v1842, %v1841
    %v1880 = vpack.c.b16 %v1844, %v1843
    %v1881 = vpack.c.b16 %v1846, %v1845
    %v1882 = vpack.c.b16 %v1848, %v1847
    %v1883 = vpack.c.b16 %v1850, %v1849
    %v1884 = vpack.c.b16 %v1852, %v1851
    %1917 = vmatprep.subr.bf16.mxu0 0
    %1918 = vmatpush1.bf16.msra.mxu0 %v1860
    %1919 = vmatprep.subr.bf16.mxu0 0
    %1920 = vmatpush1.bf16.msra.mxu0 %v1859
    %1921 = vmatprep.subr.bf16.mxu0 0
    %1922 = vmatpush1.bf16.msra.mxu0 %v1858
    %1923 = vmatprep.subr.bf16.mxu0 0
    %1924 = vmatpush1.bf16.msra.mxu0 %v1857
    %1925 = vmatprep.subr.bf16.mxu0 0
    %1926 = vmatpush1.bf16.msra.mxu0 %v1856
    %1927 = vmatprep.subr.bf16.mxu0 0
    %1928 = vmatpush1.bf16.msra.mxu0 %v1855
    %1929 = vmatprep.subr.bf16.mxu0 0
    %1930 = vmatpush1.bf16.msra.mxu0 %v1854
    %1931 = vmatprep.subr.bf16.mxu0 0
    %1932 = vmatpush1.bf16.msra.mxu0 %v1853
    %1933 = vmatprep.subr.bf16.mxu0 0
    %1934 = vmatpush2.bf16.msra.mxu0 %v1868
    %1935 = vmatprep.subr.bf16.mxu0 0
    %1936 = vmatpush2.bf16.msra.mxu0 %v1867
    %1937 = vmatprep.subr.bf16.mxu0 0
    %1938 = vmatpush2.bf16.msra.mxu0 %v1866
    %1939 = vmatprep.subr.bf16.mxu0 0
    %1940 = vmatpush2.bf16.msra.mxu0 %v1865
    %1941 = vmatprep.subr.bf16.mxu0 0
    %1942 = vmatpush2.bf16.msra.mxu0 %v1864
    %1943 = vmatprep.subr.bf16.mxu0 0
    %1944 = vmatpush2.bf16.msra.mxu0 %v1863
    %1945 = vmatprep.subr.bf16.mxu0 0
    %1946 = vmatpush2.bf16.msra.mxu0 %v1862
    %1947 = vmatprep.subr.bf16.mxu0 0
    %1948 = vmatpush2.bf16.msra.mxu0 %v1861
    %1949 = vmatprep.mubr.bf16.mxu0 %v1651
    %1950 = vmatmul.mubr.bf16.gmra.mxu0 %v1650
    %v1951 = vpop.f32.mrf.mxu0
    %v1952 = vadd.f32 %v1723, %v1951
    %v1953 = vpop.f32.mrf.mxu0
    %v1954 = vpop.f32.mrf.mxu0
    %v1955 = vadd.f32 %v1723, %v1954
    %v1956 = vpop.f32.mrf.mxu0
    %1957 = vdwg.mxu0
    %1958 = vmatprep.subr.bf16.mxu0 0
    %1959 = vmatpush1.bf16.msra.mxu0 %v1876
    %1960 = vmatprep.subr.bf16.mxu0 0
    %1961 = vmatpush1.bf16.msra.mxu0 %v1875
    %1962 = vmatprep.subr.bf16.mxu0 0
    %1963 = vmatpush1.bf16.msra.mxu0 %v1874
    %1964 = vmatprep.subr.bf16.mxu0 0
    %1965 = vmatpush1.bf16.msra.mxu0 %v1873
    %1966 = vmatprep.subr.bf16.mxu0 0
    %1967 = vmatpush1.bf16.msra.mxu0 %v1872
    %1968 = vmatprep.subr.bf16.mxu0 0
    %1969 = vmatpush1.bf16.msra.mxu0 %v1871
    %1970 = vmatprep.subr.bf16.mxu0 0
    %1971 = vmatpush1.bf16.msra.mxu0 %v1870
    %1972 = vmatprep.subr.bf16.mxu0 0
    %1973 = vmatpush1.bf16.msra.mxu0 %v1869
    %1974 = vmatprep.subr.bf16.mxu0 0
    %1975 = vmatpush2.bf16.msra.mxu0 %v1884
    %1976 = vmatprep.subr.bf16.mxu0 0
    %1977 = vmatpush2.bf16.msra.mxu0 %v1883
    %1978 = vmatprep.subr.bf16.mxu0 0
    %1979 = vmatpush2.bf16.msra.mxu0 %v1882
    %1980 = vmatprep.subr.bf16.mxu0 0
    %1981 = vmatpush2.bf16.msra.mxu0 %v1881
    %1982 = vmatprep.subr.bf16.mxu0 0
    %1983 = vmatpush2.bf16.msra.mxu0 %v1880
    %1984 = vmatprep.subr.bf16.mxu0 0
    %1985 = vmatpush2.bf16.msra.mxu0 %v1879
    %1986 = vmatprep.subr.bf16.mxu0 0
    %1987 = vmatpush2.bf16.msra.mxu0 %v1878
    %1988 = vmatprep.subr.bf16.mxu0 0
    %1989 = vmatpush2.bf16.msra.mxu0 %v1877
    %1990 = vmatprep.mubr.bf16.mxu0 %v1653
    %1991 = vmatmul.mubr.bf16.gmra.mxu0 %v1652
    %v1992 = vpop.f32.mrf.mxu0
    %v1993 = vadd.f32 %v1952, %v1992
    %v1994 = vpop.f32.mrf.mxu0
    %v1995 = vpop.f32.mrf.mxu0
    %v1996 = vadd.f32 %v1955, %v1995
    %v1997 = vpop.f32.mrf.mxu0
    %1998 = vdwg.mxu0
    %1999 = vst [vmem:[#allocation10] sm:$0xff] %v1993
    %2000 = vst [vmem:[#allocation10 + $0x8] sm:$0xff] %v1996
    // Predicated region
    $region38: #{_forward_impl.1} parent=1 // pred_check
      _
    $region39: #{_forward_impl.1} parent=1 // pred_check_branch
      %2002 = sbr.rel (0) target = $region41
    $region40: #{_forward_impl.1} parent=1 // pred_region
      %s2004 = ssub.s32 256, 256
      %2005 = vsyncadd [#allocation4], %s2004
      %s2006 = sshll.u32 [#allocation10], 4
      %s2007 = int_to_ptr.vmem [resolvable:$true] %s2006
      %2012 = dma.vmem_to_hbm [thread:$0]  %s2007, 256, %s5, [#allocation4], 128, 128, 8
    $region41: #{_forward_impl.1} parent=1 // pred_fallthru
      _
    // Predicated region
    $region42: #{_forward_impl.1} parent=1 // pred_check
      _
    $region43: #{_forward_impl.1} parent=1 // pred_check_branch
      %2014 = sbr.rel (0) target = $region45
    $region44: #{_forward_impl.1} parent=1 // pred_region
      %2015 = dma.done [#allocation4], 256
    $region45: #{_forward_impl.1} parent=1 // pred_fallthru
      _
    %2016 = vsyncpa [#allocation3], 1
    %2017 = vsyncpa [#allocation6], 1
    %2018 = vsyncpa [#allocation9], 1
    %2019 = vsyncpa [#allocation4], 1

</llo_original>
